<compile_context>
chip_gen: v5e
topology: v5e:2x2
jax: 0.10.0
libtpu: 0.0.40
codegen_flags: <defaults>
</compile_context>

<pallas_src>
import functools

import jax
import jax.numpy as jnp
from jax.experimental import pallas as pl
from jax.experimental.pallas import tpu as pltpu

BN_EPS = 1e-5
TILE_B = 512                      # sweep 512/1024; ~hundreds of KiB of VMEM
VMEM_LIMIT = 32 * 1024 * 1024


def _round_up(a, m):
    return ((a + m - 1) // m) * m


# --------------------------------------------------------------------------
# Pass 1: per-tile partial BatchNorm statistics of h0 = x @ W1 (no b1 -- it
# cancels under BN).  Batch axis is "parallel" (each tile writes its own
# output block), so v7x can split it across both TensorCores.
# --------------------------------------------------------------------------
def bn_stats_kernel(x_ref, w1_ref, sums_ref, sumsq_ref, *, valid_rows):
    i = pl.program_id(0)
    tile_b = x_ref.shape[0]

    # Mask rows past the true batch size (last tile may be ragged; OOB reads
    # are undefined, so select them to exact 0 before the matmul).
    row = jax.lax.broadcasted_iota(jnp.int32, (tile_b, 1), 0) + i * tile_b
    x = jnp.where(row < valid_rows, x_ref[...], 0.0).astype(jnp.bfloat16)

    # Linear 1 on the MXU: bf16 operands, f32 accumulation.
    h = jnp.dot(x, w1_ref[...], preferred_element_type=jnp.float32)  # (tb, H)

    sums_ref[...] = jnp.sum(h, axis=0, keepdims=True).reshape(1, 1, -1)
    sumsq_ref[...] = jnp.sum(h * h, axis=0, keepdims=True).reshape(1, 1, -1)


# --------------------------------------------------------------------------
# Pass 2: recompute Linear1 (E tiny -> recompute beats spilling h), apply the
# folded BN affine + ReLU, Linear2, write (tile_b, C) logits directly.
# Batch axis "parallel" -> megacore split on v7x.
# --------------------------------------------------------------------------
def vib_apply_kernel(scale_ref, shift_ref, x_ref, w1_ref, w2_ref, b2_ref,
                     out_ref):
    x = x_ref[...].astype(jnp.bfloat16)
    h = jnp.dot(x, w1_ref[...], preferred_element_type=jnp.float32)   # (tb, H)
    y = jnp.maximum(h * scale_ref[...] + shift_ref[...], 0.0)         # BN+ReLU
    logits = jnp.dot(y.astype(w2_ref.dtype), w2_ref[...],
                     preferred_element_type=jnp.float32)              # (tb, C)
    out_ref[...] = (logits + b2_ref[...]).astype(out_ref.dtype)


@jax.jit
def vib_classifier_forward(x, w1, b1, gamma, beta, w2, b2):
    """x: (B, E) float32.  Returns logits (B, C) float32."""
    del b1  # cancelled exactly by BatchNorm's batch-mean subtraction
    B, E = x.shape
    H = w1.shape[1]
    C = w2.shape[1]

    tile_b = min(TILE_B, _round_up(B, 8))
    n_tiles = pl.cdiv(B, tile_b)

    # ---- Pass 1: per-tile partial sums / sums-of-squares ----
    psum, psumsq = pl.pallas_call(
        functools.partial(bn_stats_kernel, valid_rows=B),
        out_shape=(jax.ShapeDtypeStruct((n_tiles, 1, H), jnp.float32),
                   jax.ShapeDtypeStruct((n_tiles, 1, H), jnp.float32)),
        grid_spec=pltpu.PrefetchScalarGridSpec(
            num_scalar_prefetch=0,
            grid=(n_tiles,),
            in_specs=[
                pl.BlockSpec((tile_b, E), lambda i: (i, 0)),     # x tile (f32)
                pl.BlockSpec((E, H), lambda i: (0, 0)),          # w1 (bf16)
            ],
            out_specs=[
                pl.BlockSpec((1, 1, H), lambda i: (i, 0, 0)),    # partial sum
                pl.BlockSpec((1, 1, H), lambda i: (i, 0, 0)),    # partial sumsq
            ],
        ),
        compiler_params=pltpu.CompilerParams(
            dimension_semantics=("parallel",),
            vmem_limit_bytes=VMEM_LIMIT,
        ),
    )(x, w1)

    # ---- Tiny JAX epilogue: fold stats into the per-feature BN affine ----
    n = jnp.float32(B)
    mean = jnp.sum(psum, axis=0) / n                              # (1, H)
    var = jnp.maximum(jnp.sum(psumsq, axis=0) / n - mean * mean, 0.0)
    scale = gamma * jax.lax.rsqrt(var + BN_EPS)                   # (1, H)
    shift = beta - mean * scale                                   # (1, H)

    # ---- Pass 2: normalize + ReLU + Linear2, direct (B, C) output ----
    logits = pl.pallas_call(
        vib_apply_kernel,
        out_shape=jax.ShapeDtypeStruct((B, C), jnp.float32),
        grid_spec=pltpu.PrefetchScalarGridSpec(
            num_scalar_prefetch=0,
            grid=(n_tiles,),
            in_specs=[
                pl.BlockSpec((1, H), lambda i: (0, 0)),          # scale
                pl.BlockSpec((1, H), lambda i: (0, 0)),          # shift
                pl.BlockSpec((tile_b, E), lambda i: (i, 0)),     # x tile (f32)
                pl.BlockSpec((E, H), lambda i: (0, 0)),          # w1 (bf16)
                pl.BlockSpec((H, C), lambda i: (0, 0)),          # w2 (bf16)
                pl.BlockSpec((1, C), lambda i: (0, 0)),          # b2
            ],
            out_specs=pl.BlockSpec((tile_b, C), lambda i: (i, 0)),
        ),
        compiler_params=pltpu.CompilerParams(
            dimension_semantics=("parallel",),
            vmem_limit_bytes=VMEM_LIMIT,
        ),
    )(scale, shift, x, w1, w2, b2)

    return logits


def init_params(key, dim_embedding, dim_hidden, num_class):
    """PyTorch-style init: Linear U(-1/sqrt(fan_in), 1/sqrt(fan_in)),
    BatchNorm1d weight=1 bias=0.  Weights stored (in, out), bf16 for the MXU."""
    k1, k2, k3, k4 = jax.random.split(key, 4)
    bound1 = 1.0 / jnp.sqrt(jnp.float32(dim_embedding))
    bound2 = 1.0 / jnp.sqrt(jnp.float32(dim_hidden))
    w1 = jax.random.uniform(k1, (dim_embedding, dim_hidden), jnp.float32,
                            -bound1, bound1).astype(jnp.bfloat16)
    b1 = jax.random.uniform(k2, (1, dim_hidden), jnp.float32, -bound1, bound1)
    w2 = jax.random.uniform(k3, (dim_hidden, num_class), jnp.float32,
                            -bound2, bound2).astype(jnp.bfloat16)
    b2 = jax.random.uniform(k4, (1, num_class), jnp.float32, -bound2, bound2)
    gamma = jnp.ones((1, dim_hidden), jnp.float32)
    beta = jnp.zeros((1, dim_hidden), jnp.float32)
    return w1, b1, gamma, beta, w2, b2


def reference_forward(x, w1, b1, gamma, beta, w2, b2):
    """Pure-JAX reference: standard PyTorch training-mode BatchNorm formula
    (with b1 included), same bf16 matmul numerics."""
    h = jnp.dot(x.astype(jnp.bfloat16), w1.astype(jnp.bfloat16),
                preferred_element_type=jnp.float32) + b1
    mean = jnp.mean(h, axis=0, keepdims=True)
    var = jnp.mean((h - mean) ** 2, axis=0, keepdims=True)
    y = (h - mean) * jax.lax.rsqrt(var + BN_EPS) * gamma + beta
    y = jnp.maximum(y, 0.0)
    return jnp.dot(y.astype(jnp.bfloat16), w2.astype(jnp.bfloat16),
                   preferred_element_type=jnp.float32) + b2


if __name__ == "__main__":
    # B=1000 with TILE_B=512 exercises a multi-tile grid AND a ragged last
    # tile (rows 1000..1023 masked in the stats pass, discarded in pass 2).
    B, dim_embedding, dim_hidden, num_class = 1000, 32, 128, 4

    key = jax.random.PRNGKey(0)
    kx, kp = jax.random.split(key)
    x = jax.random.normal(kx, (B, dim_embedding), jnp.float32)
    params = init_params(kp, dim_embedding, dim_hidden, num_class)

    logits = jax.block_until_ready(vib_classifier_forward(x, *params))

    ref = reference_forward(x, *params)
    assert logits.shape == (B, num_class)
    assert jnp.allclose(logits, ref, atol=1e-2, rtol=1e-2), "mismatch vs reference"

    print("KERNEL_OK")
</pallas_src>

<mosaic_0001>
module attributes {stable_mosaic.version = 11 : i64} {
  func.func @bn_stats_kernel(%arg0: i32, %arg1: memref<512x32xf32, #tpu.memory_space<vmem>>, %arg2: memref<32x128xbf16, #tpu.memory_space<vmem>>, %arg3: memref<1x1x128xf32, #tpu.memory_space<vmem>>, %arg4: memref<1x1x128xf32, #tpu.memory_space<vmem>>) attributes {dimension_semantics = [#tpu.dimension_semantics<parallel>], iteration_bounds = array<i64: 2>, scalar_prefetch = 0 : i64, scratch_operands = 0 : i64, tpu.core_type = #tpu.core_type<tc>, window_params = [{transform_indices = @transform_0, window_bounds = array<i64: 512, 32>}, {pipeline_mode = #tpu.pipeline_mode<synchronous>, transform_indices = @transform_1, window_bounds = array<i64: 32, 128>}, {transform_indices = @transform_2, window_bounds = array<i64: 1, 1, 128>}, {transform_indices = @transform_3, window_bounds = array<i64: 1, 1, 128>}]} {
    %0 = tpu.iota {dimensions = array<i32: 0>} : vector<512x1xi32>
    %c512_i32 = arith.constant 512 : i32
    %1 = arith.muli %arg0, %c512_i32 : i32
    %2 = vector.broadcast %1 : i32 to vector<512x1xi32>
    %3 = arith.addi %0, %2 : vector<512x1xi32>
    %c1000_i32 = arith.constant 1000 : i32
    %4 = vector.broadcast %c1000_i32 : i32 to vector<512x1xi32>
    %5 = arith.cmpi slt, %3, %4 : vector<512x1xi32>
    %c0 = arith.constant 0 : index
    %c0_0 = arith.constant 0 : index
    %6 = vector.load %arg1[%c0, %c0_0] : memref<512x32xf32, #tpu.memory_space<vmem>>, vector<512x32xf32>
    %cst = arith.constant 0.000000e+00 : f32
    %7 = vector.shape_cast %5 : vector<512x1xi1> to vector<512x1xi1>
    %8 = vector.broadcast %7 : vector<512x1xi1> to vector<512x32xi1>
    %9 = vector.broadcast %cst : f32 to vector<512x32xf32>
    %10 = arith.select %8, %6, %9 : vector<512x32xi1>, vector<512x32xf32>
    %11 = arith.truncf %10 : vector<512x32xf32> to vector<512x32xbf16>
    %c0_1 = arith.constant 0 : index
    %c0_2 = arith.constant 0 : index
    %12 = vector.load %arg2[%c0_1, %c0_2] : memref<32x128xbf16, #tpu.memory_space<vmem>>, vector<32x128xbf16>
    %cst_3 = arith.constant dense<0.000000e+00> : vector<512x128xf32>
    %13 = tpu.matmul %11, %12, %cst_3 {dimension_numbers = #tpu.dot_dimension_numbers<[1], [0], [0], [1], [0, 0, 1, 1], [], []>} : vector<512x32xbf16>, vector<32x128xbf16>, vector<512x128xf32> -> vector<512x128xf32>
    %cst_4 = arith.constant dense<0.000000e+00> : vector<128xf32>
    %14 = vector.multi_reduction <add>, %13, %cst_4 [0] : vector<512x128xf32> to vector<128xf32>
    %15 = vector.shape_cast %14 : vector<128xf32> to vector<1x128xf32>
    %16 = vector.shape_cast %15 : vector<1x128xf32> to vector<1x1x128xf32>
    %c0_5 = arith.constant 0 : index
    %c0_6 = arith.constant 0 : index
    %c0_7 = arith.constant 0 : index
    %17 = vector.load %arg3[%c0_5, %c0_6, %c0_7] : memref<1x1x128xf32, #tpu.memory_space<vmem>>, vector<1x1x128xf32>
    tpu.vector_store %arg3[%c0_5, %c0_6, %c0_7], %16 {strides = array<i32>} : memref<1x1x128xf32, #tpu.memory_space<vmem>>, vector<1x1x128xf32>,
    %18 = arith.mulf %13, %13 : vector<512x128xf32>
    %cst_8 = arith.constant dense<0.000000e+00> : vector<128xf32>
    %19 = vector.multi_reduction <add>, %18, %cst_8 [0] : vector<512x128xf32> to vector<128xf32>
    %20 = vector.shape_cast %19 : vector<128xf32> to vector<1x128xf32>
    %21 = vector.shape_cast %20 : vector<1x128xf32> to vector<1x1x128xf32>
    %c0_9 = arith.constant 0 : index
    %c0_10 = arith.constant 0 : index
    %c0_11 = arith.constant 0 : index
    %22 = vector.load %arg4[%c0_9, %c0_10, %c0_11] : memref<1x1x128xf32, #tpu.memory_space<vmem>>, vector<1x1x128xf32>
    tpu.vector_store %arg4[%c0_9, %c0_10, %c0_11], %21 {strides = array<i32>} : memref<1x1x128xf32, #tpu.memory_space<vmem>>, vector<1x1x128xf32>,
    return
  }
  func.func @transform_0(%arg0: i32) -> (i32, i32) {
    %c0_i32 = arith.constant 0 : i32
    %c0_i32_0 = arith.constant 0 : i32
    return %arg0, %c0_i32 : i32, i32
  }
  func.func @transform_1(%arg0: i32) -> (i32, i32) {
    %c0_i32 = arith.constant 0 : i32
    %c0_i32_0 = arith.constant 0 : i32
    %c0_i32_1 = arith.constant 0 : i32
    return %c0_i32, %c0_i32_0 : i32, i32
  }
  func.func @transform_2(%arg0: i32) -> (i32, i32, i32) {
    %c0_i32 = arith.constant 0 : i32
    %c0_i32_0 = arith.constant 0 : i32
    %c0_i32_1 = arith.constant 0 : i32
    return %arg0, %c0_i32, %c0_i32_0 : i32, i32, i32
  }
  func.func @transform_3(%arg0: i32) -> (i32, i32, i32) {
    %c0_i32 = arith.constant 0 : i32
    %c0_i32_0 = arith.constant 0 : i32
    %c0_i32_1 = arith.constant 0 : i32
    return %arg0, %c0_i32, %c0_i32_0 : i32, i32, i32
  }
}

module attributes {stable_mosaic.version = 11 : i64} {
  func.func @vib_apply_kernel(%arg0: i32, %arg1: memref<1x128xf32, #tpu.memory_space<vmem>>, %arg2: memref<1x128xf32, #tpu.memory_space<vmem>>, %arg3: memref<512x32xf32, #tpu.memory_space<vmem>>, %arg4: memref<32x128xbf16, #tpu.memory_space<vmem>>, %arg5: memref<128x4xbf16, #tpu.memory_space<vmem>>, %arg6: memref<1x4xf32, #tpu.memory_space<vmem>>, %arg7: memref<512x4xf32, #tpu.memory_space<vmem>>) attributes {dimension_semantics = [#tpu.dimension_semantics<parallel>], iteration_bounds = array<i64: 2>, scalar_prefetch = 0 : i64, scratch_operands = 0 : i64, tpu.core_type = #tpu.core_type<tc>, window_params = [{pipeline_mode = #tpu.pipeline_mode<synchronous>, transform_indices = @transform_0, window_bounds = array<i64: 1, 128>}, {pipeline_mode = #tpu.pipeline_mode<synchronous>, transform_indices = @transform_1, window_bounds = array<i64: 1, 128>}, {transform_indices = @transform_2, window_bounds = array<i64: 512, 32>}, {pipeline_mode = #tpu.pipeline_mode<synchronous>, transform_indices = @transform_3, window_bounds = array<i64: 32, 128>}, {pipeline_mode = #tpu.pipeline_mode<synchronous>, transform_indices = @transform_4, window_bounds = array<i64: 128, 4>}, {pipeline_mode = #tpu.pipeline_mode<synchronous>, transform_indices = @transform_5, window_bounds = array<i64: 1, 4>}, {transform_indices = @transform_6, window_bounds = array<i64: 512, 4>}]} {
    %c0 = arith.constant 0 : index
    %c0_0 = arith.constant 0 : index
    %0 = vector.load %arg3[%c0, %c0_0] : memref<512x32xf32, #tpu.memory_space<vmem>>, vector<512x32xf32>
    %1 = arith.truncf %0 : vector<512x32xf32> to vector<512x32xbf16>
    %c0_1 = arith.constant 0 : index
    %c0_2 = arith.constant 0 : index
    %2 = vector.load %arg4[%c0_1, %c0_2] : memref<32x128xbf16, #tpu.memory_space<vmem>>, vector<32x128xbf16>
    %cst = arith.constant dense<0.000000e+00> : vector<512x128xf32>
    %3 = tpu.matmul %1, %2, %cst {dimension_numbers = #tpu.dot_dimension_numbers<[1], [0], [0], [1], [0, 0, 1, 1], [], []>} : vector<512x32xbf16>, vector<32x128xbf16>, vector<512x128xf32> -> vector<512x128xf32>
    %c0_3 = arith.constant 0 : index
    %c0_4 = arith.constant 0 : index
    %4 = vector.load %arg1[%c0_3, %c0_4] : memref<1x128xf32, #tpu.memory_space<vmem>>, vector<1x128xf32>
    %5 = vector.broadcast %4 : vector<1x128xf32> to vector<512x128xf32>
    %6 = arith.mulf %3, %5 : vector<512x128xf32>
    %c0_5 = arith.constant 0 : index
    %c0_6 = arith.constant 0 : index
    %7 = vector.load %arg2[%c0_5, %c0_6] : memref<1x128xf32, #tpu.memory_space<vmem>>, vector<1x128xf32>
    %8 = vector.broadcast %7 : vector<1x128xf32> to vector<512x128xf32>
    %9 = arith.addf %6, %8 : vector<512x128xf32>
    %cst_7 = arith.constant 0.000000e+00 : f32
    %10 = vector.broadcast %cst_7 : f32 to vector<512x128xf32>
    %11 = arith.maximumf %9, %10 : vector<512x128xf32>
    %12 = arith.truncf %11 : vector<512x128xf32> to vector<512x128xbf16>
    %c0_8 = arith.constant 0 : index
    %c0_9 = arith.constant 0 : index
    %13 = vector.load %arg5[%c0_8, %c0_9] : memref<128x4xbf16, #tpu.memory_space<vmem>>, vector<128x4xbf16>
    %cst_10 = arith.constant dense<0.000000e+00> : vector<512x4xf32>
    %14 = tpu.matmul %12, %13, %cst_10 {dimension_numbers = #tpu.dot_dimension_numbers<[1], [0], [0], [1], [0, 0, 1, 1], [], []>} : vector<512x128xbf16>, vector<128x4xbf16>, vector<512x4xf32> -> vector<512x4xf32>
    %c0_11 = arith.constant 0 : index
    %c0_12 = arith.constant 0 : index
    %15 = vector.load %arg6[%c0_11, %c0_12] : memref<1x4xf32, #tpu.memory_space<vmem>>, vector<1x4xf32>
    %16 = vector.broadcast %15 : vector<1x4xf32> to vector<512x4xf32>
    %17 = arith.addf %14, %16 : vector<512x4xf32>
    %c0_13 = arith.constant 0 : index
    %c0_14 = arith.constant 0 : index
    %18 = vector.load %arg7[%c0_13, %c0_14] : memref<512x4xf32, #tpu.memory_space<vmem>>, vector<512x4xf32>
    tpu.vector_store %arg7[%c0_13, %c0_14], %17 {strides = array<i32>} : memref<512x4xf32, #tpu.memory_space<vmem>>, vector<512x4xf32>,
    return
  }
  func.func @transform_0(%arg0: i32) -> (i32, i32) {
    %c0_i32 = arith.constant 0 : i32
    %c0_i32_0 = arith.constant 0 : i32
    %c0_i32_1 = arith.constant 0 : i32
    return %c0_i32, %c0_i32_0 : i32, i32
  }
  func.func @transform_1(%arg0: i32) -> (i32, i32) {
    %c0_i32 = arith.constant 0 : i32
    %c0_i32_0 = arith.constant 0 : i32
    %c0_i32_1 = arith.constant 0 : i32
    return %c0_i32, %c0_i32_0 : i32, i32
  }
  func.func @transform_2(%arg0: i32) -> (i32, i32) {
    %c0_i32 = arith.constant 0 : i32
    %c0_i32_0 = arith.constant 0 : i32
    return %arg0, %c0_i32 : i32, i32
  }
  func.func @transform_3(%arg0: i32) -> (i32, i32) {
    %c0_i32 = arith.constant 0 : i32
    %c0_i32_0 = arith.constant 0 : i32
    %c0_i32_1 = arith.constant 0 : i32
    return %c0_i32, %c0_i32_0 : i32, i32
  }
  func.func @transform_4(%arg0: i32) -> (i32, i32) {
    %c0_i32 = arith.constant 0 : i32
    %c0_i32_0 = arith.constant 0 : i32
    %c0_i32_1 = arith.constant 0 : i32
    return %c0_i32, %c0_i32_0 : i32, i32
  }
  func.func @transform_5(%arg0: i32) -> (i32, i32) {
    %c0_i32 = arith.constant 0 : i32
    %c0_i32_0 = arith.constant 0 : i32
    %c0_i32_1 = arith.constant 0 : i32
    return %c0_i32, %c0_i32_0 : i32, i32
  }
  func.func @transform_6(%arg0: i32) -> (i32, i32) {
    %c0_i32 = arith.constant 0 : i32
    %c0_i32_0 = arith.constant 0 : i32
    return %arg0, %c0_i32 : i32, i32
  }
}

</mosaic_0001>

<llo_original>
// kernel: vib_classifier_forward.3
$region0: #{vib_classifier_forward.3}
  #allocation0 [shape = 'u32[]', space=smem, size = 0x4, offset = 0x4, fixed_abs, tag = 'smem constant byte address 0x4 - core index']
  #allocation1 [shape = 'u32[72,128]{1,0:T(1,128)}', space=vmem, size = 0x9000, scoped, tag = 'internal scratch']
  %s0 = inlined_call_operand.vmem [shape: f32[1,128], index: 0, kind: input, shape index: {}]
  %s1 = inlined_call_operand.vmem [shape: f32[1,128], index: 1, kind: input, shape index: {}]
  %s2 = inlined_call_operand.vmem [shape: f32[1000,32], index: 2, kind: input, shape index: {}]
  %s3 = inlined_call_operand.vmem [shape: bf16[32,128], index: 3, kind: input, shape index: {}]
  %s4 = inlined_call_operand.vmem [shape: bf16[128,4], index: 4, kind: input, shape index: {}]
  %s5 = inlined_call_operand.vmem [shape: f32[1,4], index: 5, kind: input, shape index: {}]
  %s6 = inlined_call_operand.vmem [shape: f32[1000,4], index: 6, kind: output, shape index: {}]
  %s7 = sld [smem:[#allocation0]]
  $region105: #{vib_classifier_forward.3} parent=0
    _
  %s9 = ssub.s32 1, %s7
  %s10 = scalar_select 0, %s9, %s7
  $region1: #{vib_classifier_forward.3} parent=0
    #allocation2 [shape = 'u8[524288]{0}', space=vmem, size = 0x80000, scoped, tag = 'output window, operand 0']
    loop: start=0, step=1, limit=4
    $region2: #{vib_classifier_forward.3} parent=1 // loop_pre_header
      _
    $region3: #{vib_classifier_forward.3} parent=1 // loop_header
      %s12 = sphi 0, %s16
      %p13 = scmp.ge.s32.totalorder %s12, 4
      %s20 = sphi 0, %s20
      %s22 = sphi 0, %s20
      %s23 = sphi 0, %s22
      %s37 = sphi 0, %s23
      %s41 = sphi 0, %s41
      %s43 = sphi 0, %s41
      %s44 = sphi 0, %s43
      %s58 = sphi 0, %s44
      %s64 = sphi 0, %s66
      %s67 = sphi 0, %s64
      %s68 = sphi 0, %s67
      %s84 = sphi 0, %s68
      %s88 = sphi 0, %s88
      %s90 = sphi 0, %s88
      %s91 = sphi 0, %s90
      %s105 = sphi 0, %s91
      %s109 = sphi 0, %s109
      %s111 = sphi 0, %s109
      %s112 = sphi 0, %s111
      %s126 = sphi 0, %s112
      %s130 = sphi 0, %s130
      %s132 = sphi 0, %s130
      %s133 = sphi 0, %s132
      %s147 = sphi 0, %s133
      %s153 = sphi 0, %s155
      %s156 = sphi 0, %s153
      %s157 = sphi 0, %s156
      %s173 = sphi 0, %s157
    $region4: #{vib_classifier_forward.3} parent=1 // loop_header_branch
      %15 = sbr.rel (%p13) target = $region8
    $region5: #{vib_classifier_forward.3} parent=1 // loop_body
      %s17 = ssub.s32 %s12, 1
      %s18 = ssub.s32 %s12, 2
      %s19 = sadd.s32 %s12, 1
      %s21 = sadd.s32 %s20, 1
      %p24 = scmp.eq.s32.totalorder %s12, 1
      %p25 = scmp.ne.s32.totalorder %s20, %s22
      %p26 = scmp.eq.s32.totalorder %s12, 0
      %p27 = por %p25, %p26
      %p28 = scmp.ne.s32.totalorder %s20, %s22
      %p29 = scmp.eq.s32.totalorder %s17, 1
      %p30 = por %p28, %p29
      %p31 = scmp.ne.s32.totalorder %s22, %s23
      %p32 = scmp.eq.s32.totalorder %s17, 0
      %p33 = por %p31, %p32
      %p34 = scmp.ne.s32.totalorder %s22, %s23
      %p35 = scmp.eq.s32.totalorder %s18, 1
      %p36 = por %p34, %p35
      %p38 = scmp.ne.s32.totalorder %s23, %s37
      %p39 = scmp.eq.s32.totalorder %s18, 0
      %p40 = por %p38, %p39
      %s42 = sadd.s32 %s41, 1
      %p45 = scmp.eq.s32.totalorder %s12, 1
      %p46 = scmp.ne.s32.totalorder %s41, %s43
      %p47 = scmp.eq.s32.totalorder %s12, 0
      %p48 = por %p46, %p47
      %p49 = scmp.ne.s32.totalorder %s41, %s43
      %p50 = scmp.eq.s32.totalorder %s17, 1
      %p51 = por %p49, %p50
      %p52 = scmp.ne.s32.totalorder %s43, %s44
      %p53 = scmp.eq.s32.totalorder %s17, 0
      %p54 = por %p52, %p53
      %p55 = scmp.ne.s32.totalorder %s43, %s44
      %p56 = scmp.eq.s32.totalorder %s18, 1
      %p57 = por %p55, %p56
      %p59 = scmp.ne.s32.totalorder %s44, %s58
      %p60 = scmp.eq.s32.totalorder %s18, 0
      %p61 = por %p59, %p60
      %s62 = ssub.s32 %s12, %s19
      %p63 = scmp.eq.s32.totalorder %s62, 0
      %s65 = sadd.s32 %s64, 1
      %s66 = scalar_select %p63, %s64, %s65
      %p69 = pneg %p63
      %p70 = scmp.eq.s32.totalorder %s12, 1
      %p71 = por %p69, %p70
      %p72 = scmp.ne.s32.totalorder %s64, %s67
      %p73 = scmp.eq.s32.totalorder %s12, 0
      %p74 = por %p72, %p73
      %p75 = scmp.ne.s32.totalorder %s64, %s67
      %p76 = scmp.eq.s32.totalorder %s17, 1
      %p77 = por %p75, %p76
      %p78 = scmp.ne.s32.totalorder %s67, %s68
      %p79 = scmp.eq.s32.totalorder %s17, 0
      %p80 = por %p78, %p79
      %p81 = scmp.ne.s32.totalorder %s67, %s68
      %p82 = scmp.eq.s32.totalorder %s18, 1
      %p83 = por %p81, %p82
      %p85 = scmp.ne.s32.totalorder %s68, %s84
      %p86 = scmp.eq.s32.totalorder %s18, 0
      %p87 = por %p85, %p86
      %s89 = sadd.s32 %s88, 1
      %p92 = scmp.eq.s32.totalorder %s12, 1
      %p93 = scmp.ne.s32.totalorder %s88, %s90
      %p94 = scmp.eq.s32.totalorder %s12, 0
      %p95 = por %p93, %p94
      %p96 = scmp.ne.s32.totalorder %s88, %s90
      %p97 = scmp.eq.s32.totalorder %s17, 1
      %p98 = por %p96, %p97
      %p99 = scmp.ne.s32.totalorder %s90, %s91
      %p100 = scmp.eq.s32.totalorder %s17, 0
      %p101 = por %p99, %p100
      %p102 = scmp.ne.s32.totalorder %s90, %s91
      %p103 = scmp.eq.s32.totalorder %s18, 1
      %p104 = por %p102, %p103
      %p106 = scmp.ne.s32.totalorder %s91, %s105
      %p107 = scmp.eq.s32.totalorder %s18, 0
      %p108 = por %p106, %p107
      %s110 = sadd.s32 %s109, 1
      %p113 = scmp.eq.s32.totalorder %s12, 1
      %p114 = scmp.ne.s32.totalorder %s109, %s111
      %p115 = scmp.eq.s32.totalorder %s12, 0
      %p116 = por %p114, %p115
      %p117 = scmp.ne.s32.totalorder %s109, %s111
      %p118 = scmp.eq.s32.totalorder %s17, 1
      %p119 = por %p117, %p118
      %p120 = scmp.ne.s32.totalorder %s111, %s112
      %p121 = scmp.eq.s32.totalorder %s17, 0
      %p122 = por %p120, %p121
      %p123 = scmp.ne.s32.totalorder %s111, %s112
      %p124 = scmp.eq.s32.totalorder %s18, 1
      %p125 = por %p123, %p124
      %p127 = scmp.ne.s32.totalorder %s112, %s126
      %p128 = scmp.eq.s32.totalorder %s18, 0
      %p129 = por %p127, %p128
      %s131 = sadd.s32 %s130, 1
      %p134 = scmp.eq.s32.totalorder %s12, 1
      %p135 = scmp.ne.s32.totalorder %s130, %s132
      %p136 = scmp.eq.s32.totalorder %s12, 0
      %p137 = por %p135, %p136
      %p138 = scmp.ne.s32.totalorder %s130, %s132
      %p139 = scmp.eq.s32.totalorder %s17, 1
      %p140 = por %p138, %p139
      %p141 = scmp.ne.s32.totalorder %s132, %s133
      %p142 = scmp.eq.s32.totalorder %s17, 0
      %p143 = por %p141, %p142
      %p144 = scmp.ne.s32.totalorder %s132, %s133
      %p145 = scmp.eq.s32.totalorder %s18, 1
      %p146 = por %p144, %p145
      %p148 = scmp.ne.s32.totalorder %s133, %s147
      %p149 = scmp.eq.s32.totalorder %s18, 0
      %p150 = por %p148, %p149
      %s151 = ssub.s32 %s12, %s19
      %p152 = scmp.eq.s32.totalorder %s151, 0
      %s154 = sadd.s32 %s153, 1
      %s155 = scalar_select %p152, %s153, %s154
      %p158 = pneg %p152
      %p159 = scmp.eq.s32.totalorder %s12, 1
      %p160 = por %p158, %p159
      %p161 = scmp.ne.s32.totalorder %s153, %s156
      %p162 = scmp.eq.s32.totalorder %s12, 0
      %p163 = por %p161, %p162
      %p164 = scmp.ne.s32.totalorder %s153, %s156
      %p165 = scmp.eq.s32.totalorder %s17, 1
      %p166 = por %p164, %p165
      %p167 = scmp.ne.s32.totalorder %s156, %s157
      %p168 = scmp.eq.s32.totalorder %s17, 0
      %p169 = por %p167, %p168
      %p170 = scmp.ne.s32.totalorder %s156, %s157
      %p171 = scmp.eq.s32.totalorder %s18, 1
      %p172 = por %p170, %p171
      %p174 = scmp.ne.s32.totalorder %s157, %s173
      %p175 = scmp.eq.s32.totalorder %s18, 0
      %p176 = por %p174, %p175
      %p177 = scmp.le.s32.totalorder 1, %s12
      %p178 = scmp.lt.s32.totalorder %s12, 3
      %p179 = pnand %p177, %p178
      %p180 = pneg %p179
      // Predicated region
      $region9: #{vib_classifier_forward.3} parent=5 // pred_check
        _
      $region10: #{vib_classifier_forward.3} parent=5 // pred_check_branch
        %182 = sbr.rel (%p179) target = $region12
      $region11: #{vib_classifier_forward.3} parent=5 // pred_region
        %s183 = ssub.s32 %s12, 1
        // Predicated region
        $region13: #{vib_classifier_forward.3} parent=11 // pred_check
          %p184 = pneg %p33
        $region14: #{vib_classifier_forward.3} parent=11 // pred_check_branch
          %186 = sbr.rel (%p184) target = $region16
        $region15: #{vib_classifier_forward.3} parent=11 // pred_region
          _
        $region16: #{vib_classifier_forward.3} parent=11 // pred_fallthru
          _
        // Predicated region
        $region17: #{vib_classifier_forward.3} parent=11 // pred_check
          %p187 = pneg %p54
        $region18: #{vib_classifier_forward.3} parent=11 // pred_check_branch
          %189 = sbr.rel (%p187) target = $region20
        $region19: #{vib_classifier_forward.3} parent=11 // pred_region
          _
        $region20: #{vib_classifier_forward.3} parent=11 // pred_fallthru
          _
        // Predicated region
        $region21: #{vib_classifier_forward.3} parent=11 // pred_check
          %p190 = pneg %p101
        $region22: #{vib_classifier_forward.3} parent=11 // pred_check_branch
          %192 = sbr.rel (%p190) target = $region24
        $region23: #{vib_classifier_forward.3} parent=11 // pred_region
          _
        $region24: #{vib_classifier_forward.3} parent=11 // pred_fallthru
          _
        // Predicated region
        $region25: #{vib_classifier_forward.3} parent=11 // pred_check
          %p193 = pneg %p122
        $region26: #{vib_classifier_forward.3} parent=11 // pred_check_branch
          %195 = sbr.rel (%p193) target = $region28
        $region27: #{vib_classifier_forward.3} parent=11 // pred_region
          _
        $region28: #{vib_classifier_forward.3} parent=11 // pred_fallthru
          _
        // Predicated region
        $region29: #{vib_classifier_forward.3} parent=11 // pred_check
          %p196 = pneg %p143
        $region30: #{vib_classifier_forward.3} parent=11 // pred_check_branch
          %198 = sbr.rel (%p196) target = $region32
        $region31: #{vib_classifier_forward.3} parent=11 // pred_region
          _
        $region32: #{vib_classifier_forward.3} parent=11 // pred_fallthru
          _
      $region12: #{vib_classifier_forward.3} parent=5 // pred_fallthru
        _
      %p199 = scmp.lt.s32.totalorder %s12, 2
      // Predicated region
      $region33: #{vib_classifier_forward.3} parent=5 // pred_check
        %p200 = pneg %p199
      $region34: #{vib_classifier_forward.3} parent=5 // pred_check_branch
        %202 = sbr.rel (%p200) target = $region36
      $region35: #{vib_classifier_forward.3} parent=5 // pred_region
        // Predicated region
        $region37: #{vib_classifier_forward.3} parent=35 // pred_check
          %p203 = pneg %p74
        $region38: #{vib_classifier_forward.3} parent=35 // pred_check_branch
          %205 = sbr.rel (%p203) target = $region40
        $region39: #{vib_classifier_forward.3} parent=35 // pred_region
          %s206 = smul.u32 64, %s12
          %s207 = ssub.s32 125, %s206
          %p208 = scmp.lt.s32.totalorder %s207, 64
          %s209 = scalar_select %p208, %s207, 64
          %s210 = smul.u32 8, %s209
          %p211 = scmp.lt.s32.totalorder %s206, 124
          %s212 = scalar_select %p211, %s206, 124
          %s213 = smul.addr %s212, 8
          %s214 = scalar_lea.vmem %s2, %s213
          %s215 = smul.u32 64, %s12
          %s216 = ssub.s32 125, %s215
          %p217 = scmp.lt.s32.totalorder %s216, 64
          %s218 = scalar_select %p217, %s216, 64
          %s219 = smul.u32 8, %s218
        $region40: #{vib_classifier_forward.3} parent=35 // pred_fallthru
          _
      $region36: #{vib_classifier_forward.3} parent=5 // pred_fallthru
        _
      %p220 = scmp.le.s32.totalorder 1, %s12
      %p221 = scmp.lt.s32.totalorder %s12, 3
      %p222 = pnand %p220, %p221
      %p223 = pneg %p222
      // Predicated region
      $region41: #{vib_classifier_forward.3} parent=5 // pred_check
        _
      $region42: #{vib_classifier_forward.3} parent=5 // pred_check_branch
        %225 = sbr.rel (%p222) target = $region44
      $region43: #{vib_classifier_forward.3} parent=5 // pred_region
        %s226 = ssub.s32 %s12, 1
        %p227 = pneg %p33
        %p228 = pneg %p30
        %p229 = pneg %p54
        %p230 = pneg %p51
        %s231 = smul.u32 64, %s17
        %s232 = ssub.s32 125, %s231
        %p233 = scmp.lt.s32.totalorder %s232, 64
        %s234 = scalar_select %p233, %s232, 64
        %s235 = smul.u32 8, %s234
        %p236 = scmp.lt.s32.totalorder %s231, 124
        %s237 = scalar_select %p236, %s231, 124
        %s238 = smul.addr %s237, 8
        %s239 = scalar_lea.vmem %s2, %s238
        %p240 = pneg %p80
        %p241 = pneg %p77
        %p242 = pneg %p101
        %p243 = pneg %p98
        %p244 = pneg %p122
        %p245 = pneg %p119
        %p246 = pneg %p143
        %p247 = pneg %p140
        %p248 = pneg %p169
        %p249 = pneg %p166
        %s250 = sand.u32 %s156, 1
        %s251 = sand.u32 %s156, 1
        %s252 = smul.addr %s251, 512
        %s253 = scalar_lea.vmem [#allocation2], %s252
        %s254 = smul.u32 64, %s17
        %s255 = ssub.s32 125, %s254
        %p256 = scmp.lt.s32.totalorder %s255, 64
        %s257 = scalar_select %p256, %s255, 64
        %s258 = smul.u32 8, %s257
        %p259 = scmp.lt.s32.totalorder %s254, 124
        %s260 = scalar_select %p259, %s254, 124
        %s261 = smul.addr %s260, 8
        %s262 = scalar_lea.vmem %s2, %s261
        %s263 = smul.u32 64, %s17
        %s264 = ssub.s32 125, %s263
        %p265 = scmp.lt.s32.totalorder %s264, 64
        %s266 = scalar_select %p265, %s264, 64
        %s267 = smul.u32 8, %s266
        %s268 = smul.u32 64, %s17
        %s269 = ssub.s32 125, %s268
        %p270 = scmp.lt.s32.totalorder %s269, 64
        %s271 = scalar_select %p270, %s269, 64
        %s272 = smul.u32 8, %s271
        %v274 = vld [vmem:[%s262] sm:$0xff]
        %v275 = vld [vmem:[%s262 + $0x8] sm:$0xff]
        %v276 = vld [vmem:[%s262 + $0x10] sm:$0xff]
        %v277 = vld [vmem:[%s262 + $0x18] sm:$0xff]
        %v278 = vld [vmem:[%s262 + $0x20] sm:$0xff]
        %v279 = vld [vmem:[%s262 + $0x28] sm:$0xff]
        %v280 = vld [vmem:[%s262 + $0x30] sm:$0xff]
        %v281 = vld [vmem:[%s262 + $0x38] sm:$0xff]
        %v282 = vld [vmem:[%s262 + $0x40] sm:$0xff]
        %v283 = vld [vmem:[%s262 + $0x48] sm:$0xff]
        %v284 = vld [vmem:[%s262 + $0x50] sm:$0xff]
        %v285 = vld [vmem:[%s262 + $0x58] sm:$0xff]
        %v286 = vld [vmem:[%s262 + $0x60] sm:$0xff]
        %v287 = vld [vmem:[%s262 + $0x68] sm:$0xff]
        %v288 = vld [vmem:[%s262 + $0x70] sm:$0xff]
        %v289 = vld [vmem:[%s262 + $0x78] sm:$0xff]
        %v290 = vld [vmem:[%s262 + $0x80] sm:$0xff]
        %v291 = vld [vmem:[%s262 + $0x88] sm:$0xff]
        %v292 = vld [vmem:[%s262 + $0x90] sm:$0xff]
        %v293 = vld [vmem:[%s262 + $0x98] sm:$0xff]
        %v294 = vld [vmem:[%s262 + $0xa0] sm:$0xff]
        %v295 = vld [vmem:[%s262 + $0xa8] sm:$0xff]
        %v296 = vld [vmem:[%s262 + $0xb0] sm:$0xff]
        %v297 = vld [vmem:[%s262 + $0xb8] sm:$0xff]
        %v298 = vld [vmem:[%s262 + $0xc0] sm:$0xff]
        %v299 = vld [vmem:[%s262 + $0xc8] sm:$0xff]
        %v300 = vld [vmem:[%s262 + $0xd0] sm:$0xff]
        %v301 = vld [vmem:[%s262 + $0xd8] sm:$0xff]
        %v302 = vld [vmem:[%s262 + $0xe0] sm:$0xff]
        %v303 = vld [vmem:[%s262 + $0xe8] sm:$0xff]
        %v304 = vld [vmem:[%s262 + $0xf0] sm:$0xff]
        %v305 = vld [vmem:[%s262 + $0xf8] sm:$0xff]
        %v306 = vld [vmem:[%s262 + $0x100] sm:$0xff]
        %v307 = vld [vmem:[%s262 + $0x108] sm:$0xff]
        %v308 = vld [vmem:[%s262 + $0x110] sm:$0xff]
        %v309 = vld [vmem:[%s262 + $0x118] sm:$0xff]
        %v310 = vld [vmem:[%s262 + $0x120] sm:$0xff]
        %v311 = vld [vmem:[%s262 + $0x128] sm:$0xff]
        %v312 = vld [vmem:[%s262 + $0x130] sm:$0xff]
        %v313 = vld [vmem:[%s262 + $0x138] sm:$0xff]
        %v314 = vld [vmem:[%s262 + $0x140] sm:$0xff]
        %v315 = vld [vmem:[%s262 + $0x148] sm:$0xff]
        %v316 = vld [vmem:[%s262 + $0x150] sm:$0xff]
        %v317 = vld [vmem:[%s262 + $0x158] sm:$0xff]
        %v318 = vld [vmem:[%s262 + $0x160] sm:$0xff]
        %v319 = vld [vmem:[%s262 + $0x168] sm:$0xff]
        %v320 = vld [vmem:[%s262 + $0x170] sm:$0xff]
        %v321 = vld [vmem:[%s262 + $0x178] sm:$0xff]
        %v322 = vld [vmem:[%s262 + $0x180] sm:$0xff]
        %v323 = vld [vmem:[%s262 + $0x188] sm:$0xff]
        %v324 = vld [vmem:[%s262 + $0x190] sm:$0xff]
        %v325 = vld [vmem:[%s262 + $0x198] sm:$0xff]
        %v326 = vld [vmem:[%s262 + $0x1a0] sm:$0xff]
        %v327 = vld [vmem:[%s262 + $0x1a8] sm:$0xff]
        %v328 = vld [vmem:[%s262 + $0x1b0] sm:$0xff]
        %v329 = vld [vmem:[%s262 + $0x1b8] sm:$0xff]
        %v330 = vld [vmem:[%s262 + $0x1c0] sm:$0xff]
        %v331 = vld [vmem:[%s262 + $0x1c8] sm:$0xff]
        %v332 = vld [vmem:[%s262 + $0x1d0] sm:$0xff]
        %v333 = vld [vmem:[%s262 + $0x1d8] sm:$0xff]
        %v334 = vld [vmem:[%s262 + $0x1e0] sm:$0xff]
        %v335 = vld [vmem:[%s262 + $0x1e8] sm:$0xff]
        %v336 = vld [vmem:[%s262 + $0x1f0] sm:$0xff]
        %v337 = vld [vmem:[%s262 + $0x1f8] sm:$0xff]
        %v338 = vpack.c.bf16 %v275, %v274
        %v339 = vpack.c.bf16 %v277, %v276
        %v340 = vpack.c.bf16 %v279, %v278
        %v341 = vpack.c.bf16 %v281, %v280
        %v342 = vpack.c.bf16 %v283, %v282
        %v343 = vpack.c.bf16 %v285, %v284
        %v344 = vpack.c.bf16 %v287, %v286
        %v345 = vpack.c.bf16 %v289, %v288
        %v346 = vpack.c.bf16 %v291, %v290
        %v347 = vpack.c.bf16 %v293, %v292
        %v348 = vpack.c.bf16 %v295, %v294
        %v349 = vpack.c.bf16 %v297, %v296
        %v350 = vpack.c.bf16 %v299, %v298
        %v351 = vpack.c.bf16 %v301, %v300
        %v352 = vpack.c.bf16 %v303, %v302
        %v353 = vpack.c.bf16 %v305, %v304
        %v354 = vpack.c.bf16 %v307, %v306
        %v355 = vpack.c.bf16 %v309, %v308
        %v356 = vpack.c.bf16 %v311, %v310
        %v357 = vpack.c.bf16 %v313, %v312
        %v358 = vpack.c.bf16 %v315, %v314
        %v359 = vpack.c.bf16 %v317, %v316
        %v360 = vpack.c.bf16 %v319, %v318
        %v361 = vpack.c.bf16 %v321, %v320
        %v362 = vpack.c.bf16 %v323, %v322
        %v363 = vpack.c.bf16 %v325, %v324
        %v364 = vpack.c.bf16 %v327, %v326
        %v365 = vpack.c.bf16 %v329, %v328
        %v366 = vpack.c.bf16 %v331, %v330
        %v367 = vpack.c.bf16 %v333, %v332
        %v368 = vpack.c.bf16 %v335, %v334
        %v369 = vpack.c.bf16 %v337, %v336
        %v370 = vld [vmem:[%s3] sm:$0xf]
        %v371 = vld [vmem:[%s3 + $0x4] sm:$0xf]
        %v372 = vld [vmem:[%s3 + $0x8] sm:$0xf]
        %v373 = vld [vmem:[%s3 + $0xc] sm:$0xf]
        %v378 = vunpack.c.l.b16 %v370
        %v379 = vunpack.c.l.b16 %v371
        %v380 = vunpack.c.l.b16 %v372
        %v381 = vunpack.c.l.b16 %v373
        %v382 = vpack.c.b16 %v379, %v378
        %v383 = vpack.c.b16 %v381, %v380
        %vm386 = vcmask 261120
        %v388 = vsel %vm386, %v338, 0
        %v391 = vsel %vm386, %v339, 0
        %v394 = vsel %vm386, %v340, 0
        %v397 = vsel %vm386, %v341, 0
        %v400 = vsel %vm386, %v342, 0
        %v403 = vsel %vm386, %v343, 0
        %v406 = vsel %vm386, %v344, 0
        %v409 = vsel %vm386, %v345, 0
        %v412 = vsel %vm386, %v346, 0
        %v415 = vsel %vm386, %v347, 0
        %v418 = vsel %vm386, %v348, 0
        %v421 = vsel %vm386, %v349, 0
        %v424 = vsel %vm386, %v350, 0
        %v427 = vsel %vm386, %v351, 0
        %v430 = vsel %vm386, %v352, 0
        %v433 = vsel %vm386, %v353, 0
        %v436 = vsel %vm386, %v354, 0
        %v439 = vsel %vm386, %v355, 0
        %v442 = vsel %vm386, %v356, 0
        %v445 = vsel %vm386, %v357, 0
        %v448 = vsel %vm386, %v358, 0
        %v451 = vsel %vm386, %v359, 0
        %v454 = vsel %vm386, %v360, 0
        %v457 = vsel %vm386, %v361, 0
        %v460 = vsel %vm386, %v362, 0
        %v463 = vsel %vm386, %v363, 0
        %v466 = vsel %vm386, %v364, 0
        %v469 = vsel %vm386, %v365, 0
        %v472 = vsel %vm386, %v366, 0
        %v475 = vsel %vm386, %v367, 0
        %v478 = vsel %vm386, %v368, 0
        %v481 = vsel %vm386, %v369, 0
        %483 = vmatpush.bf16.msra.mxu0 0
        %484 = vmatpush.bf16.msra.mxu0 0
        %485 = vmatpush.bf16.msra.mxu0 0
        %486 = vmatpush.bf16.msra.mxu0 0
        %487 = vmatpush.bf16.msra.mxu0 0
        %488 = vmatpush.bf16.msra.mxu0 0
        %489 = vmatpush.bf16.msra.mxu0 %v383
        %490 = vmatpush.bf16.msra.mxu0 %v382
        %491 = vmatmul.bf16.gmra.mxu0 %v388
        %v492 = vpop.f32.mrf.mxu0
        %v493 = vadd.f32 0.0, %v492
        %v494 = vpop.f32.mrf.mxu0
        %v495 = vadd.f32 0.0, %v494
        %496 = vmatmul.bf16.gmra.mxu0 %v391
        %v497 = vpop.f32.mrf.mxu0
        %v498 = vadd.f32 0.0, %v497
        %v499 = vpop.f32.mrf.mxu0
        %v500 = vadd.f32 0.0, %v499
        %501 = vmatmul.bf16.gmra.mxu0 %v394
        %v502 = vpop.f32.mrf.mxu0
        %v503 = vadd.f32 0.0, %v502
        %v504 = vpop.f32.mrf.mxu0
        %v505 = vadd.f32 0.0, %v504
        %506 = vmatmul.bf16.gmra.mxu0 %v397
        %v507 = vpop.f32.mrf.mxu0
        %v508 = vadd.f32 0.0, %v507
        %v509 = vpop.f32.mrf.mxu0
        %v510 = vadd.f32 0.0, %v509
        %511 = vmatmul.bf16.gmra.mxu0 %v400
        %v512 = vpop.f32.mrf.mxu0
        %v513 = vadd.f32 0.0, %v512
        %v514 = vpop.f32.mrf.mxu0
        %v515 = vadd.f32 0.0, %v514
        %516 = vmatmul.bf16.gmra.mxu0 %v403
        %v517 = vpop.f32.mrf.mxu0
        %v518 = vadd.f32 0.0, %v517
        %v519 = vpop.f32.mrf.mxu0
        %v520 = vadd.f32 0.0, %v519
        %521 = vmatmul.bf16.gmra.mxu0 %v406
        %v522 = vpop.f32.mrf.mxu0
        %v523 = vadd.f32 0.0, %v522
        %v524 = vpop.f32.mrf.mxu0
        %v525 = vadd.f32 0.0, %v524
        %526 = vmatmul.bf16.gmra.mxu0 %v409
        %v527 = vpop.f32.mrf.mxu0
        %v528 = vadd.f32 0.0, %v527
        %v529 = vpop.f32.mrf.mxu0
        %v530 = vadd.f32 0.0, %v529
        %531 = vmatmul.bf16.gmra.mxu0 %v412
        %v532 = vpop.f32.mrf.mxu0
        %v533 = vadd.f32 0.0, %v532
        %v534 = vpop.f32.mrf.mxu0
        %v535 = vadd.f32 0.0, %v534
        %536 = vmatmul.bf16.gmra.mxu0 %v415
        %v537 = vpop.f32.mrf.mxu0
        %v538 = vadd.f32 0.0, %v537
        %v539 = vpop.f32.mrf.mxu0
        %v540 = vadd.f32 0.0, %v539
        %541 = vmatmul.bf16.gmra.mxu0 %v418
        %v542 = vpop.f32.mrf.mxu0
        %v543 = vadd.f32 0.0, %v542
        %v544 = vpop.f32.mrf.mxu0
        %v545 = vadd.f32 0.0, %v544
        %546 = vmatmul.bf16.gmra.mxu0 %v421
        %v547 = vpop.f32.mrf.mxu0
        %v548 = vadd.f32 0.0, %v547
        %v549 = vpop.f32.mrf.mxu0
        %v550 = vadd.f32 0.0, %v549
        %551 = vmatmul.bf16.gmra.mxu0 %v424
        %v552 = vpop.f32.mrf.mxu0
        %v553 = vadd.f32 0.0, %v552
        %v554 = vpop.f32.mrf.mxu0
        %v555 = vadd.f32 0.0, %v554
        %556 = vmatmul.bf16.gmra.mxu0 %v427
        %v557 = vpop.f32.mrf.mxu0
        %v558 = vadd.f32 0.0, %v557
        %v559 = vpop.f32.mrf.mxu0
        %v560 = vadd.f32 0.0, %v559
        %561 = vmatmul.bf16.gmra.mxu0 %v430
        %v562 = vpop.f32.mrf.mxu0
        %v563 = vadd.f32 0.0, %v562
        %v564 = vpop.f32.mrf.mxu0
        %v565 = vadd.f32 0.0, %v564
        %566 = vmatmul.bf16.gmra.mxu0 %v433
        %v567 = vpop.f32.mrf.mxu0
        %v568 = vadd.f32 0.0, %v567
        %v569 = vpop.f32.mrf.mxu0
        %v570 = vadd.f32 0.0, %v569
        %571 = vmatmul.bf16.gmra.mxu0 %v436
        %v572 = vpop.f32.mrf.mxu0
        %v573 = vadd.f32 0.0, %v572
        %v574 = vpop.f32.mrf.mxu0
        %v575 = vadd.f32 0.0, %v574
        %576 = vmatmul.bf16.gmra.mxu0 %v439
        %v577 = vpop.f32.mrf.mxu0
        %v578 = vadd.f32 0.0, %v577
        %v579 = vpop.f32.mrf.mxu0
        %v580 = vadd.f32 0.0, %v579
        %581 = vmatmul.bf16.gmra.mxu0 %v442
        %v582 = vpop.f32.mrf.mxu0
        %v583 = vadd.f32 0.0, %v582
        %v584 = vpop.f32.mrf.mxu0
        %v585 = vadd.f32 0.0, %v584
        %586 = vmatmul.bf16.gmra.mxu0 %v445
        %v587 = vpop.f32.mrf.mxu0
        %v588 = vadd.f32 0.0, %v587
        %v589 = vpop.f32.mrf.mxu0
        %v590 = vadd.f32 0.0, %v589
        %591 = vmatmul.bf16.gmra.mxu0 %v448
        %v592 = vpop.f32.mrf.mxu0
        %v593 = vadd.f32 0.0, %v592
        %v594 = vpop.f32.mrf.mxu0
        %v595 = vadd.f32 0.0, %v594
        %596 = vmatmul.bf16.gmra.mxu0 %v451
        %v597 = vpop.f32.mrf.mxu0
        %v598 = vadd.f32 0.0, %v597
        %v599 = vpop.f32.mrf.mxu0
        %v600 = vadd.f32 0.0, %v599
        %601 = vmatmul.bf16.gmra.mxu0 %v454
        %v602 = vpop.f32.mrf.mxu0
        %v603 = vadd.f32 0.0, %v602
        %v604 = vpop.f32.mrf.mxu0
        %v605 = vadd.f32 0.0, %v604
        %606 = vmatmul.bf16.gmra.mxu0 %v457
        %v607 = vpop.f32.mrf.mxu0
        %v608 = vadd.f32 0.0, %v607
        %v609 = vpop.f32.mrf.mxu0
        %v610 = vadd.f32 0.0, %v609
        %611 = vmatmul.bf16.gmra.mxu0 %v460
        %v612 = vpop.f32.mrf.mxu0
        %v613 = vadd.f32 0.0, %v612
        %v614 = vpop.f32.mrf.mxu0
        %v615 = vadd.f32 0.0, %v614
        %616 = vmatmul.bf16.gmra.mxu0 %v463
        %v617 = vpop.f32.mrf.mxu0
        %v618 = vadd.f32 0.0, %v617
        %v619 = vpop.f32.mrf.mxu0
        %v620 = vadd.f32 0.0, %v619
        %621 = vmatmul.bf16.gmra.mxu0 %v466
        %v622 = vpop.f32.mrf.mxu0
        %v623 = vadd.f32 0.0, %v622
        %v624 = vpop.f32.mrf.mxu0
        %v625 = vadd.f32 0.0, %v624
        %626 = vmatmul.bf16.gmra.mxu0 %v469
        %v627 = vpop.f32.mrf.mxu0
        %v628 = vadd.f32 0.0, %v627
        %v629 = vpop.f32.mrf.mxu0
        %v630 = vadd.f32 0.0, %v629
        %631 = vmatmul.bf16.gmra.mxu0 %v472
        %v632 = vpop.f32.mrf.mxu0
        %v633 = vadd.f32 0.0, %v632
        %v634 = vpop.f32.mrf.mxu0
        %v635 = vadd.f32 0.0, %v634
        %636 = vmatmul.bf16.gmra.mxu0 %v475
        %v637 = vpop.f32.mrf.mxu0
        %v638 = vadd.f32 0.0, %v637
        %v639 = vpop.f32.mrf.mxu0
        %v640 = vadd.f32 0.0, %v639
        %641 = vmatmul.bf16.gmra.mxu0 %v478
        %v642 = vpop.f32.mrf.mxu0
        %v643 = vadd.f32 0.0, %v642
        %v644 = vpop.f32.mrf.mxu0
        %v645 = vadd.f32 0.0, %v644
        %646 = vmatmul.bf16.gmra.mxu0 %v481
        %v647 = vpop.f32.mrf.mxu0
        %v648 = vadd.f32 0.0, %v647
        %v649 = vpop.f32.mrf.mxu0
        %v650 = vadd.f32 0.0, %v649
        %651 = vdwg.mxu0
        %v652 = vld [vmem:[%s0] sm:$0x1]
        %v654 = vperm.slane %v652, 0
        %v656 = vmul.f32 %v493, %v654
        %v657 = vmul.f32 %v495, %v654
        %v658 = vmul.f32 %v498, %v654
        %v659 = vmul.f32 %v500, %v654
        %v660 = vmul.f32 %v503, %v654
        %v661 = vmul.f32 %v505, %v654
        %v662 = vmul.f32 %v508, %v654
        %v663 = vmul.f32 %v510, %v654
        %v664 = vmul.f32 %v513, %v654
        %v665 = vmul.f32 %v515, %v654
        %v666 = vmul.f32 %v518, %v654
        %v667 = vmul.f32 %v520, %v654
        %v668 = vmul.f32 %v523, %v654
        %v669 = vmul.f32 %v525, %v654
        %v670 = vmul.f32 %v528, %v654
        %v671 = vmul.f32 %v530, %v654
        %v672 = vmul.f32 %v533, %v654
        %v673 = vmul.f32 %v535, %v654
        %v674 = vmul.f32 %v538, %v654
        %v675 = vmul.f32 %v540, %v654
        %v676 = vmul.f32 %v543, %v654
        %v677 = vmul.f32 %v545, %v654
        %v678 = vmul.f32 %v548, %v654
        %v679 = vmul.f32 %v550, %v654
        %v680 = vmul.f32 %v553, %v654
        %v681 = vmul.f32 %v555, %v654
        %v682 = vmul.f32 %v558, %v654
        %v683 = vmul.f32 %v560, %v654
        %v684 = vmul.f32 %v563, %v654
        %v685 = vmul.f32 %v565, %v654
        %v686 = vmul.f32 %v568, %v654
        %v687 = vmul.f32 %v570, %v654
        %v688 = vmul.f32 %v573, %v654
        %v689 = vmul.f32 %v575, %v654
        %v690 = vmul.f32 %v578, %v654
        %v691 = vmul.f32 %v580, %v654
        %v692 = vmul.f32 %v583, %v654
        %v693 = vmul.f32 %v585, %v654
        %v694 = vmul.f32 %v588, %v654
        %v695 = vmul.f32 %v590, %v654
        %v696 = vmul.f32 %v593, %v654
        %v697 = vmul.f32 %v595, %v654
        %v698 = vmul.f32 %v598, %v654
        %v699 = vmul.f32 %v600, %v654
        %v700 = vmul.f32 %v603, %v654
        %v701 = vmul.f32 %v605, %v654
        %v702 = vmul.f32 %v608, %v654
        %v703 = vmul.f32 %v610, %v654
        %v704 = vmul.f32 %v613, %v654
        %v705 = vmul.f32 %v615, %v654
        %v706 = vmul.f32 %v618, %v654
        %v707 = vmul.f32 %v620, %v654
        %v708 = vmul.f32 %v623, %v654
        %v709 = vmul.f32 %v625, %v654
        %v710 = vmul.f32 %v628, %v654
        %v711 = vmul.f32 %v630, %v654
        %v712 = vmul.f32 %v633, %v654
        %v713 = vmul.f32 %v635, %v654
        %v714 = vmul.f32 %v638, %v654
        %v715 = vmul.f32 %v640, %v654
        %v716 = vmul.f32 %v643, %v654
        %v717 = vmul.f32 %v645, %v654
        %v718 = vmul.f32 %v648, %v654
        %v719 = vmul.f32 %v650, %v654
        %v720 = vld [vmem:[%s1] sm:$0x1]
        %v722 = vperm.slane %v720, 0
        %v724 = vadd.f32 %v656, %v722
        %v725 = vadd.f32 %v657, %v722
        %v726 = vadd.f32 %v658, %v722
        %v727 = vadd.f32 %v659, %v722
        %v728 = vadd.f32 %v660, %v722
        %v729 = vadd.f32 %v661, %v722
        %v730 = vadd.f32 %v662, %v722
        %v731 = vadd.f32 %v663, %v722
        %v732 = vadd.f32 %v664, %v722
        %v733 = vadd.f32 %v665, %v722
        %v734 = vadd.f32 %v666, %v722
        %v735 = vadd.f32 %v667, %v722
        %v736 = vadd.f32 %v668, %v722
        %v737 = vadd.f32 %v669, %v722
        %v738 = vadd.f32 %v670, %v722
        %v739 = vadd.f32 %v671, %v722
        %v740 = vadd.f32 %v672, %v722
        %v741 = vadd.f32 %v673, %v722
        %v742 = vadd.f32 %v674, %v722
        %v743 = vadd.f32 %v675, %v722
        %v744 = vadd.f32 %v676, %v722
        %v745 = vadd.f32 %v677, %v722
        %v746 = vadd.f32 %v678, %v722
        %v747 = vadd.f32 %v679, %v722
        %v748 = vadd.f32 %v680, %v722
        %v749 = vadd.f32 %v681, %v722
        %v750 = vadd.f32 %v682, %v722
        %v751 = vadd.f32 %v683, %v722
        %v752 = vadd.f32 %v684, %v722
        %v753 = vadd.f32 %v685, %v722
        %v754 = vadd.f32 %v686, %v722
        %v755 = vadd.f32 %v687, %v722
        %v756 = vadd.f32 %v688, %v722
        %v757 = vadd.f32 %v689, %v722
        %v758 = vadd.f32 %v690, %v722
        %v759 = vadd.f32 %v691, %v722
        %v760 = vadd.f32 %v692, %v722
        %v761 = vadd.f32 %v693, %v722
        %v762 = vadd.f32 %v694, %v722
        %v763 = vadd.f32 %v695, %v722
        %v764 = vadd.f32 %v696, %v722
        %v765 = vadd.f32 %v697, %v722
        %v766 = vadd.f32 %v698, %v722
        %v767 = vadd.f32 %v699, %v722
        %v768 = vadd.f32 %v700, %v722
        %v769 = vadd.f32 %v701, %v722
        %v770 = vadd.f32 %v702, %v722
        %v771 = vadd.f32 %v703, %v722
        %v772 = vadd.f32 %v704, %v722
        %v773 = vadd.f32 %v705, %v722
        %v774 = vadd.f32 %v706, %v722
        %v775 = vadd.f32 %v707, %v722
        %v776 = vadd.f32 %v708, %v722
        %v777 = vadd.f32 %v709, %v722
        %v778 = vadd.f32 %v710, %v722
        %v779 = vadd.f32 %v711, %v722
        %v780 = vadd.f32 %v712, %v722
        %v781 = vadd.f32 %v713, %v722
        %v782 = vadd.f32 %v714, %v722
        %v783 = vadd.f32 %v715, %v722
        %v784 = vadd.f32 %v716, %v722
        %v785 = vadd.f32 %v717, %v722
        %v786 = vadd.f32 %v718, %v722
        %v787 = vadd.f32 %v719, %v722
        %v788 = vmax.f32 %v724, 0.0
        %v789 = vmax.f32 %v725, 0.0
        %v790 = vmax.f32 %v726, 0.0
        %v791 = vmax.f32 %v727, 0.0
        %v792 = vmax.f32 %v728, 0.0
        %v793 = vmax.f32 %v729, 0.0
        %v794 = vmax.f32 %v730, 0.0
        %v795 = vmax.f32 %v731, 0.0
        %v796 = vmax.f32 %v732, 0.0
        %v797 = vmax.f32 %v733, 0.0
        %v798 = vmax.f32 %v734, 0.0
        %v799 = vmax.f32 %v735, 0.0
        %v800 = vmax.f32 %v736, 0.0
        %v801 = vmax.f32 %v737, 0.0
        %v802 = vmax.f32 %v738, 0.0
        %v803 = vmax.f32 %v739, 0.0
        %v804 = vmax.f32 %v740, 0.0
        %v805 = vmax.f32 %v741, 0.0
        %v806 = vmax.f32 %v742, 0.0
        %v807 = vmax.f32 %v743, 0.0
        %v808 = vmax.f32 %v744, 0.0
        %v809 = vmax.f32 %v745, 0.0
        %v810 = vmax.f32 %v746, 0.0
        %v811 = vmax.f32 %v747, 0.0
        %v812 = vmax.f32 %v748, 0.0
        %v813 = vmax.f32 %v749, 0.0
        %v814 = vmax.f32 %v750, 0.0
        %v815 = vmax.f32 %v751, 0.0
        %v816 = vmax.f32 %v752, 0.0
        %v817 = vmax.f32 %v753, 0.0
        %v818 = vmax.f32 %v754, 0.0
        %v819 = vmax.f32 %v755, 0.0
        %v820 = vmax.f32 %v756, 0.0
        %v821 = vmax.f32 %v757, 0.0
        %v822 = vmax.f32 %v758, 0.0
        %v823 = vmax.f32 %v759, 0.0
        %v824 = vmax.f32 %v760, 0.0
        %v825 = vmax.f32 %v761, 0.0
        %v826 = vmax.f32 %v762, 0.0
        %v827 = vmax.f32 %v763, 0.0
        %v828 = vmax.f32 %v764, 0.0
        %v829 = vmax.f32 %v765, 0.0
        %v830 = vmax.f32 %v766, 0.0
        %v831 = vmax.f32 %v767, 0.0
        %v832 = vmax.f32 %v768, 0.0
        %v833 = vmax.f32 %v769, 0.0
        %v834 = vmax.f32 %v770, 0.0
        %v835 = vmax.f32 %v771, 0.0
        %v836 = vmax.f32 %v772, 0.0
        %v837 = vmax.f32 %v773, 0.0
        %v838 = vmax.f32 %v774, 0.0
        %v839 = vmax.f32 %v775, 0.0
        %v840 = vmax.f32 %v776, 0.0
        %v841 = vmax.f32 %v777, 0.0
        %v842 = vmax.f32 %v778, 0.0
        %v843 = vmax.f32 %v779, 0.0
        %v844 = vmax.f32 %v780, 0.0
        %v845 = vmax.f32 %v781, 0.0
        %v846 = vmax.f32 %v782, 0.0
        %v847 = vmax.f32 %v783, 0.0
        %v848 = vmax.f32 %v784, 0.0
        %v849 = vmax.f32 %v785, 0.0
        %v850 = vmax.f32 %v786, 0.0
        %v851 = vmax.f32 %v787, 0.0
        %v852 = vpack.c.bf16 %v789, %v788
        %v853 = vpack.c.bf16 %v791, %v790
        %v854 = vpack.c.bf16 %v793, %v792
        %v855 = vpack.c.bf16 %v795, %v794
        %v856 = vpack.c.bf16 %v797, %v796
        %v857 = vpack.c.bf16 %v799, %v798
        %v858 = vpack.c.bf16 %v801, %v800
        %v859 = vpack.c.bf16 %v803, %v802
        %v860 = vpack.c.bf16 %v805, %v804
        %v861 = vpack.c.bf16 %v807, %v806
        %v862 = vpack.c.bf16 %v809, %v808
        %v863 = vpack.c.bf16 %v811, %v810
        %v864 = vpack.c.bf16 %v813, %v812
        %v865 = vpack.c.bf16 %v815, %v814
        %v866 = vpack.c.bf16 %v817, %v816
        %v867 = vpack.c.bf16 %v819, %v818
        %v868 = vpack.c.bf16 %v821, %v820
        %v869 = vpack.c.bf16 %v823, %v822
        %v870 = vpack.c.bf16 %v825, %v824
        %v871 = vpack.c.bf16 %v827, %v826
        %v872 = vpack.c.bf16 %v829, %v828
        %v873 = vpack.c.bf16 %v831, %v830
        %v874 = vpack.c.bf16 %v833, %v832
        %v875 = vpack.c.bf16 %v835, %v834
        %v876 = vpack.c.bf16 %v837, %v836
        %v877 = vpack.c.bf16 %v839, %v838
        %v878 = vpack.c.bf16 %v841, %v840
        %v879 = vpack.c.bf16 %v843, %v842
        %v880 = vpack.c.bf16 %v845, %v844
        %v881 = vpack.c.bf16 %v847, %v846
        %v882 = vpack.c.bf16 %v849, %v848
        %v883 = vpack.c.bf16 %v851, %v850
        %v884 = vld [vmem:[%s4] sm:$0xf]
        %v885 = vld [vmem:[%s4 + $0x4] sm:$0xf]
        %v886 = vld [vmem:[%s4 + $0x8] sm:$0xf]
        %v887 = vld [vmem:[%s4 + $0xc] sm:$0xf]
        %v888 = vld [vmem:[%s4 + $0x10] sm:$0xf]
        %v889 = vld [vmem:[%s4 + $0x14] sm:$0xf]
        %v890 = vld [vmem:[%s4 + $0x18] sm:$0xf]
        %v891 = vld [vmem:[%s4 + $0x1c] sm:$0xf]
        %v892 = vld [vmem:[%s4 + $0x20] sm:$0xf]
        %v893 = vld [vmem:[%s4 + $0x24] sm:$0xf]
        %v894 = vld [vmem:[%s4 + $0x28] sm:$0xf]
        %v895 = vld [vmem:[%s4 + $0x2c] sm:$0xf]
        %v896 = vld [vmem:[%s4 + $0x30] sm:$0xf]
        %v897 = vld [vmem:[%s4 + $0x34] sm:$0xf]
        %v898 = vld [vmem:[%s4 + $0x38] sm:$0xf]
        %v899 = vld [vmem:[%s4 + $0x3c] sm:$0xf]
        %v900 = vld [vmem:[%s5] sm:$0x1]
        %v902 = vperm.slane %v900, 0
        %v920 = vunpack.c.l.b16 %v884
        %v921 = vunpack.c.l.b16 %v885
        %v922 = vunpack.c.l.b16 %v886
        %v923 = vunpack.c.l.b16 %v887
        %v924 = vunpack.c.l.b16 %v888
        %v925 = vunpack.c.l.b16 %v889
        %v926 = vunpack.c.l.b16 %v890
        %v927 = vunpack.c.l.b16 %v891
        %v928 = vunpack.c.l.b16 %v892
        %v929 = vunpack.c.l.b16 %v893
        %v930 = vunpack.c.l.b16 %v894
        %v931 = vunpack.c.l.b16 %v895
        %v932 = vunpack.c.l.b16 %v896
        %v933 = vunpack.c.l.b16 %v897
        %v934 = vunpack.c.l.b16 %v898
        %v935 = vunpack.c.l.b16 %v899
        %v936 = vpack.c.b16 %v921, %v920
        %v937 = vpack.c.b16 %v923, %v922
        %v938 = vpack.c.b16 %v925, %v924
        %v939 = vpack.c.b16 %v927, %v926
        %v940 = vpack.c.b16 %v929, %v928
        %v941 = vpack.c.b16 %v931, %v930
        %v942 = vpack.c.b16 %v933, %v932
        %v943 = vpack.c.b16 %v935, %v934
        %952 = vmatpush.bf16.msra.mxu0 %v943
        %953 = vmatpush.bf16.msra.mxu0 %v942
        %954 = vmatpush.bf16.msra.mxu0 %v941
        %955 = vmatpush.bf16.msra.mxu0 %v940
        %956 = vmatpush.bf16.msra.mxu0 %v939
        %957 = vmatpush.bf16.msra.mxu0 %v938
        %958 = vmatpush.bf16.msra.mxu0 %v937
        %959 = vmatpush.bf16.msra.mxu0 %v936
        %960 = vmatmul.bf16.gmra.mxu0 %v852
        %v961 = vpop.f32.mrf.mxu0
        %v962 = vadd.f32 %v902, %v961
        %v963 = vpop.f32.mrf.mxu0
        %v964 = vadd.f32 %v902, %v963
        %965 = vmatmul.bf16.gmra.mxu0 %v853
        %v966 = vpop.f32.mrf.mxu0
        %v967 = vadd.f32 %v902, %v966
        %v968 = vpop.f32.mrf.mxu0
        %v969 = vadd.f32 %v902, %v968
        %970 = vmatmul.bf16.gmra.mxu0 %v854
        %v971 = vpop.f32.mrf.mxu0
        %v972 = vadd.f32 %v902, %v971
        %v973 = vpop.f32.mrf.mxu0
        %v974 = vadd.f32 %v902, %v973
        %975 = vmatmul.bf16.gmra.mxu0 %v855
        %v976 = vpop.f32.mrf.mxu0
        %v977 = vadd.f32 %v902, %v976
        %v978 = vpop.f32.mrf.mxu0
        %v979 = vadd.f32 %v902, %v978
        %980 = vmatmul.bf16.gmra.mxu0 %v856
        %v981 = vpop.f32.mrf.mxu0
        %v982 = vadd.f32 %v902, %v981
        %v983 = vpop.f32.mrf.mxu0
        %v984 = vadd.f32 %v902, %v983
        %985 = vmatmul.bf16.gmra.mxu0 %v857
        %v986 = vpop.f32.mrf.mxu0
        %v987 = vadd.f32 %v902, %v986
        %v988 = vpop.f32.mrf.mxu0
        %v989 = vadd.f32 %v902, %v988
        %990 = vmatmul.bf16.gmra.mxu0 %v858
        %v991 = vpop.f32.mrf.mxu0
        %v992 = vadd.f32 %v902, %v991
        %v993 = vpop.f32.mrf.mxu0
        %v994 = vadd.f32 %v902, %v993
        %995 = vmatmul.bf16.gmra.mxu0 %v859
        %v996 = vpop.f32.mrf.mxu0
        %v997 = vadd.f32 %v902, %v996
        %v998 = vpop.f32.mrf.mxu0
        %v999 = vadd.f32 %v902, %v998
        %1000 = vmatmul.bf16.gmra.mxu0 %v860
        %v1001 = vpop.f32.mrf.mxu0
        %v1002 = vadd.f32 %v902, %v1001
        %v1003 = vpop.f32.mrf.mxu0
        %v1004 = vadd.f32 %v902, %v1003
        %1005 = vmatmul.bf16.gmra.mxu0 %v861
        %v1006 = vpop.f32.mrf.mxu0
        %v1007 = vadd.f32 %v902, %v1006
        %v1008 = vpop.f32.mrf.mxu0
        %v1009 = vadd.f32 %v902, %v1008
        %1010 = vmatmul.bf16.gmra.mxu0 %v862
        %v1011 = vpop.f32.mrf.mxu0
        %v1012 = vadd.f32 %v902, %v1011
        %v1013 = vpop.f32.mrf.mxu0
        %v1014 = vadd.f32 %v902, %v1013
        %1015 = vmatmul.bf16.gmra.mxu0 %v863
        %v1016 = vpop.f32.mrf.mxu0
        %v1017 = vadd.f32 %v902, %v1016
        %v1018 = vpop.f32.mrf.mxu0
        %v1019 = vadd.f32 %v902, %v1018
        %1020 = vmatmul.bf16.gmra.mxu0 %v864
        %v1021 = vpop.f32.mrf.mxu0
        %v1022 = vadd.f32 %v902, %v1021
        %v1023 = vpop.f32.mrf.mxu0
        %v1024 = vadd.f32 %v902, %v1023
        %1025 = vmatmul.bf16.gmra.mxu0 %v865
        %v1026 = vpop.f32.mrf.mxu0
        %v1027 = vadd.f32 %v902, %v1026
        %v1028 = vpop.f32.mrf.mxu0
        %v1029 = vadd.f32 %v902, %v1028
        %1030 = vmatmul.bf16.gmra.mxu0 %v866
        %v1031 = vpop.f32.mrf.mxu0
        %v1032 = vadd.f32 %v902, %v1031
        %v1033 = vpop.f32.mrf.mxu0
        %v1034 = vadd.f32 %v902, %v1033
        %1035 = vmatmul.bf16.gmra.mxu0 %v867
        %v1036 = vpop.f32.mrf.mxu0
        %v1037 = vadd.f32 %v902, %v1036
        %v1038 = vpop.f32.mrf.mxu0
        %v1039 = vadd.f32 %v902, %v1038
        %1040 = vmatmul.bf16.gmra.mxu0 %v868
        %v1041 = vpop.f32.mrf.mxu0
        %v1042 = vadd.f32 %v902, %v1041
        %v1043 = vpop.f32.mrf.mxu0
        %v1044 = vadd.f32 %v902, %v1043
        %1045 = vmatmul.bf16.gmra.mxu0 %v869
        %v1046 = vpop.f32.mrf.mxu0
        %v1047 = vadd.f32 %v902, %v1046
        %v1048 = vpop.f32.mrf.mxu0
        %v1049 = vadd.f32 %v902, %v1048
        %1050 = vmatmul.bf16.gmra.mxu0 %v870
        %v1051 = vpop.f32.mrf.mxu0
        %v1052 = vadd.f32 %v902, %v1051
        %v1053 = vpop.f32.mrf.mxu0
        %v1054 = vadd.f32 %v902, %v1053
        %1055 = vmatmul.bf16.gmra.mxu0 %v871
        %v1056 = vpop.f32.mrf.mxu0
        %v1057 = vadd.f32 %v902, %v1056
        %v1058 = vpop.f32.mrf.mxu0
        %v1059 = vadd.f32 %v902, %v1058
        %1060 = vmatmul.bf16.gmra.mxu0 %v872
        %v1061 = vpop.f32.mrf.mxu0
        %v1062 = vadd.f32 %v902, %v1061
        %v1063 = vpop.f32.mrf.mxu0
        %v1064 = vadd.f32 %v902, %v1063
        %1065 = vmatmul.bf16.gmra.mxu0 %v873
        %v1066 = vpop.f32.mrf.mxu0
        %v1067 = vadd.f32 %v902, %v1066
        %v1068 = vpop.f32.mrf.mxu0
        %v1069 = vadd.f32 %v902, %v1068
        %1070 = vmatmul.bf16.gmra.mxu0 %v874
        %v1071 = vpop.f32.mrf.mxu0
        %v1072 = vadd.f32 %v902, %v1071
        %v1073 = vpop.f32.mrf.mxu0
        %v1074 = vadd.f32 %v902, %v1073
        %1075 = vmatmul.bf16.gmra.mxu0 %v875
        %v1076 = vpop.f32.mrf.mxu0
        %v1077 = vadd.f32 %v902, %v1076
        %v1078 = vpop.f32.mrf.mxu0
        %v1079 = vadd.f32 %v902, %v1078
        %1080 = vmatmul.bf16.gmra.mxu0 %v876
        %v1081 = vpop.f32.mrf.mxu0
        %v1082 = vadd.f32 %v902, %v1081
        %v1083 = vpop.f32.mrf.mxu0
        %v1084 = vadd.f32 %v902, %v1083
        %1085 = vmatmul.bf16.gmra.mxu0 %v877
        %v1086 = vpop.f32.mrf.mxu0
        %v1087 = vadd.f32 %v902, %v1086
        %v1088 = vpop.f32.mrf.mxu0
        %v1089 = vadd.f32 %v902, %v1088
        %1090 = vmatmul.bf16.gmra.mxu0 %v878
        %v1091 = vpop.f32.mrf.mxu0
        %v1092 = vadd.f32 %v902, %v1091
        %v1093 = vpop.f32.mrf.mxu0
        %v1094 = vadd.f32 %v902, %v1093
        %1095 = vmatmul.bf16.gmra.mxu0 %v879
        %v1096 = vpop.f32.mrf.mxu0
        %v1097 = vadd.f32 %v902, %v1096
        %v1098 = vpop.f32.mrf.mxu0
        %v1099 = vadd.f32 %v902, %v1098
        %1100 = vmatmul.bf16.gmra.mxu0 %v880
        %v1101 = vpop.f32.mrf.mxu0
        %v1102 = vadd.f32 %v902, %v1101
        %v1103 = vpop.f32.mrf.mxu0
        %v1104 = vadd.f32 %v902, %v1103
        %1105 = vmatmul.bf16.gmra.mxu0 %v881
        %v1106 = vpop.f32.mrf.mxu0
        %v1107 = vadd.f32 %v902, %v1106
        %v1108 = vpop.f32.mrf.mxu0
        %v1109 = vadd.f32 %v902, %v1108
        %1110 = vmatmul.bf16.gmra.mxu0 %v882
        %v1111 = vpop.f32.mrf.mxu0
        %v1112 = vadd.f32 %v902, %v1111
        %v1113 = vpop.f32.mrf.mxu0
        %v1114 = vadd.f32 %v902, %v1113
        %1115 = vmatmul.bf16.gmra.mxu0 %v883
        %v1116 = vpop.f32.mrf.mxu0
        %v1117 = vadd.f32 %v902, %v1116
        %v1118 = vpop.f32.mrf.mxu0
        %v1119 = vadd.f32 %v902, %v1118
        %1120 = vdwg.mxu0
        %vm1121 = vcmask 31744
        %1122 = vst.msk [vmem:[%s253] sm:$0xff] %vm1121, %v962
        %1123 = vst.msk [vmem:[%s253 + $0x8] sm:$0xff] %vm1121, %v964
        %1124 = vst.msk [vmem:[%s253 + $0x10] sm:$0xff] %vm1121, %v967
        %1125 = vst.msk [vmem:[%s253 + $0x18] sm:$0xff] %vm1121, %v969
        %1126 = vst.msk [vmem:[%s253 + $0x20] sm:$0xff] %vm1121, %v972
        %1127 = vst.msk [vmem:[%s253 + $0x28] sm:$0xff] %vm1121, %v974
        %1128 = vst.msk [vmem:[%s253 + $0x30] sm:$0xff] %vm1121, %v977
        %1129 = vst.msk [vmem:[%s253 + $0x38] sm:$0xff] %vm1121, %v979
        %1130 = vst.msk [vmem:[%s253 + $0x40] sm:$0xff] %vm1121, %v982
        %1131 = vst.msk [vmem:[%s253 + $0x48] sm:$0xff] %vm1121, %v984
        %1132 = vst.msk [vmem:[%s253 + $0x50] sm:$0xff] %vm1121, %v987
        %1133 = vst.msk [vmem:[%s253 + $0x58] sm:$0xff] %vm1121, %v989
        %1134 = vst.msk [vmem:[%s253 + $0x60] sm:$0xff] %vm1121, %v992
        %1135 = vst.msk [vmem:[%s253 + $0x68] sm:$0xff] %vm1121, %v994
        %1136 = vst.msk [vmem:[%s253 + $0x70] sm:$0xff] %vm1121, %v997
        %1137 = vst.msk [vmem:[%s253 + $0x78] sm:$0xff] %vm1121, %v999
        %1138 = vst.msk [vmem:[%s253 + $0x80] sm:$0xff] %vm1121, %v1002
        %1139 = vst.msk [vmem:[%s253 + $0x88] sm:$0xff] %vm1121, %v1004
        %1140 = vst.msk [vmem:[%s253 + $0x90] sm:$0xff] %vm1121, %v1007
        %1141 = vst.msk [vmem:[%s253 + $0x98] sm:$0xff] %vm1121, %v1009
        %1142 = vst.msk [vmem:[%s253 + $0xa0] sm:$0xff] %vm1121, %v1012
        %1143 = vst.msk [vmem:[%s253 + $0xa8] sm:$0xff] %vm1121, %v1014
        %1144 = vst.msk [vmem:[%s253 + $0xb0] sm:$0xff] %vm1121, %v1017
        %1145 = vst.msk [vmem:[%s253 + $0xb8] sm:$0xff] %vm1121, %v1019
        %1146 = vst.msk [vmem:[%s253 + $0xc0] sm:$0xff] %vm1121, %v1022
        %1147 = vst.msk [vmem:[%s253 + $0xc8] sm:$0xff] %vm1121, %v1024
        %1148 = vst.msk [vmem:[%s253 + $0xd0] sm:$0xff] %vm1121, %v1027
        %1149 = vst.msk [vmem:[%s253 + $0xd8] sm:$0xff] %vm1121, %v1029
        %1150 = vst.msk [vmem:[%s253 + $0xe0] sm:$0xff] %vm1121, %v1032
        %1151 = vst.msk [vmem:[%s253 + $0xe8] sm:$0xff] %vm1121, %v1034
        %1152 = vst.msk [vmem:[%s253 + $0xf0] sm:$0xff] %vm1121, %v1037
        %1153 = vst.msk [vmem:[%s253 + $0xf8] sm:$0xff] %vm1121, %v1039
        %1154 = vst.msk [vmem:[%s253 + $0x100] sm:$0xff] %vm1121, %v1042
        %1155 = vst.msk [vmem:[%s253 + $0x108] sm:$0xff] %vm1121, %v1044
        %1156 = vst.msk [vmem:[%s253 + $0x110] sm:$0xff] %vm1121, %v1047
        %1157 = vst.msk [vmem:[%s253 + $0x118] sm:$0xff] %vm1121, %v1049
        %1158 = vst.msk [vmem:[%s253 + $0x120] sm:$0xff] %vm1121, %v1052
        %1159 = vst.msk [vmem:[%s253 + $0x128] sm:$0xff] %vm1121, %v1054
        %1160 = vst.msk [vmem:[%s253 + $0x130] sm:$0xff] %vm1121, %v1057
        %1161 = vst.msk [vmem:[%s253 + $0x138] sm:$0xff] %vm1121, %v1059
        %1162 = vst.msk [vmem:[%s253 + $0x140] sm:$0xff] %vm1121, %v1062
        %1163 = vst.msk [vmem:[%s253 + $0x148] sm:$0xff] %vm1121, %v1064
        %1164 = vst.msk [vmem:[%s253 + $0x150] sm:$0xff] %vm1121, %v1067
        %1165 = vst.msk [vmem:[%s253 + $0x158] sm:$0xff] %vm1121, %v1069
        %1166 = vst.msk [vmem:[%s253 + $0x160] sm:$0xff] %vm1121, %v1072
        %1167 = vst.msk [vmem:[%s253 + $0x168] sm:$0xff] %vm1121, %v1074
        %1168 = vst.msk [vmem:[%s253 + $0x170] sm:$0xff] %vm1121, %v1077
        %1169 = vst.msk [vmem:[%s253 + $0x178] sm:$0xff] %vm1121, %v1079
        %1170 = vst.msk [vmem:[%s253 + $0x180] sm:$0xff] %vm1121, %v1082
        %1171 = vst.msk [vmem:[%s253 + $0x188] sm:$0xff] %vm1121, %v1084
        %1172 = vst.msk [vmem:[%s253 + $0x190] sm:$0xff] %vm1121, %v1087
        %1173 = vst.msk [vmem:[%s253 + $0x198] sm:$0xff] %vm1121, %v1089
        %1174 = vst.msk [vmem:[%s253 + $0x1a0] sm:$0xff] %vm1121, %v1092
        %1175 = vst.msk [vmem:[%s253 + $0x1a8] sm:$0xff] %vm1121, %v1094
        %1176 = vst.msk [vmem:[%s253 + $0x1b0] sm:$0xff] %vm1121, %v1097
        %1177 = vst.msk [vmem:[%s253 + $0x1b8] sm:$0xff] %vm1121, %v1099
        %1178 = vst.msk [vmem:[%s253 + $0x1c0] sm:$0xff] %vm1121, %v1102
        %1179 = vst.msk [vmem:[%s253 + $0x1c8] sm:$0xff] %vm1121, %v1104
        %1180 = vst.msk [vmem:[%s253 + $0x1d0] sm:$0xff] %vm1121, %v1107
        %1181 = vst.msk [vmem:[%s253 + $0x1d8] sm:$0xff] %vm1121, %v1109
        %1182 = vst.msk [vmem:[%s253 + $0x1e0] sm:$0xff] %vm1121, %v1112
        %1183 = vst.msk [vmem:[%s253 + $0x1e8] sm:$0xff] %vm1121, %v1114
        %1184 = vst.msk [vmem:[%s253 + $0x1f0] sm:$0xff] %vm1121, %v1117
        %1185 = vst.msk [vmem:[%s253 + $0x1f8] sm:$0xff] %vm1121, %v1119
        %s1186 = sand.u32 %s156, 1
        %s1187 = sand.u32 %s156, 1
        %s1188 = smul.addr %s1187, 512
        %s1189 = scalar_lea.vmem [#allocation2], %s1188
        // Predicated region
        $region45: #{vib_classifier_forward.3} parent=43 // pred_check
          %p1190 = pneg %p166
        $region46: #{vib_classifier_forward.3} parent=43 // pred_check_branch
          %1192 = sbr.rel (%p1190) target = $region48
        $region47: #{vib_classifier_forward.3} parent=43 // pred_region
          %s1193 = smul.u32 64, %s17
          %s1194 = ssub.s32 125, %s1193
          %p1195 = scmp.lt.s32.totalorder %s1194, 64
          %s1196 = scalar_select %p1195, %s1194, 64
          %s1197 = smul.u32 8, %s1196
          %p1198 = scmp.ne.s32.totalorder 0, %s1197
          %s1199 = smul.addr %s1193, 8
          %s1200 = scalar_lea.vmem %s6, %s1199
          // Predicated region
          $region49: #{vib_classifier_forward.3} parent=47 // pred_check
            %p1201 = pneg %p1198
          $region50: #{vib_classifier_forward.3} parent=47 // pred_check_branch
            %1203 = sbr.rel (%p1201) target = $region52
          $region51: #{vib_classifier_forward.3} parent=47 // pred_region
            // Predicated region
            $region53: #{vib_classifier_forward.3} parent=51 // pred_check
              _
            $region54: #{vib_classifier_forward.3} parent=51 // pred_check_branch
              %1205 = sbr.rel (0) target = $region56
            $region55: #{vib_classifier_forward.3} parent=51 // pred_region
              // Predicated region
              $region75: #{vib_classifier_forward.3} parent=55 // pred_check
                _
              $region76: #{vib_classifier_forward.3} parent=55 // pred_check_branch
                %1317 = sbr.rel (0) target = $region78
              $region77: #{vib_classifier_forward.3} parent=55 // pred_region
                %s1318 = sshrl.u32 %s1196, 5
                // While loop
                $region79: #{vib_classifier_forward.3} parent=77 // loop_pre_header
                  _
                $region80: #{vib_classifier_forward.3} parent=77 // loop_header
                  %s1320 = sphi 0, %s1322
                  %p1321 = scmp.ge.s32.totalorder %s1320, %s1318
                  %s1325 = sphi 0, %s1394
                  %s1326 = sphi %s1189, %s1397
                  %s1327 = sphi %s1200, %s1398
                $region81: #{vib_classifier_forward.3} parent=77 // loop_header_branch
                  %1324 = sbr.rel (%p1321) target = $region85
                $region82: #{vib_classifier_forward.3} parent=77 // loop_body
                  %v1328 = vld [vmem:[%s1326] sm:$0xff]
                  %1329 = vst [vmem:[%s1327] sm:$0xff] %v1328
                  %v1330 = vld [vmem:[%s1326 + $0x8] sm:$0xff]
                  %1331 = vst [vmem:[%s1327 + $0x8] sm:$0xff] %v1330
                  %v1332 = vld [vmem:[%s1326 + $0x10] sm:$0xff]
                  %1333 = vst [vmem:[%s1327 + $0x10] sm:$0xff] %v1332
                  %v1334 = vld [vmem:[%s1326 + $0x18] sm:$0xff]
                  %1335 = vst [vmem:[%s1327 + $0x18] sm:$0xff] %v1334
                  %v1336 = vld [vmem:[%s1326 + $0x20] sm:$0xff]
                  %1337 = vst [vmem:[%s1327 + $0x20] sm:$0xff] %v1336
                  %v1338 = vld [vmem:[%s1326 + $0x28] sm:$0xff]
                  %1339 = vst [vmem:[%s1327 + $0x28] sm:$0xff] %v1338
                  %v1340 = vld [vmem:[%s1326 + $0x30] sm:$0xff]
                  %1341 = vst [vmem:[%s1327 + $0x30] sm:$0xff] %v1340
                  %v1342 = vld [vmem:[%s1326 + $0x38] sm:$0xff]
                  %1343 = vst [vmem:[%s1327 + $0x38] sm:$0xff] %v1342
                  %v1344 = vld [vmem:[%s1326 + $0x40] sm:$0xff]
                  %1345 = vst [vmem:[%s1327 + $0x40] sm:$0xff] %v1344
                  %v1346 = vld [vmem:[%s1326 + $0x48] sm:$0xff]
                  %1347 = vst [vmem:[%s1327 + $0x48] sm:$0xff] %v1346
                  %v1348 = vld [vmem:[%s1326 + $0x50] sm:$0xff]
                  %1349 = vst [vmem:[%s1327 + $0x50] sm:$0xff] %v1348
                  %v1350 = vld [vmem:[%s1326 + $0x58] sm:$0xff]
                  %1351 = vst [vmem:[%s1327 + $0x58] sm:$0xff] %v1350
                  %v1352 = vld [vmem:[%s1326 + $0x60] sm:$0xff]
                  %1353 = vst [vmem:[%s1327 + $0x60] sm:$0xff] %v1352
                  %v1354 = vld [vmem:[%s1326 + $0x68] sm:$0xff]
                  %1355 = vst [vmem:[%s1327 + $0x68] sm:$0xff] %v1354
                  %v1356 = vld [vmem:[%s1326 + $0x70] sm:$0xff]
                  %1357 = vst [vmem:[%s1327 + $0x70] sm:$0xff] %v1356
                  %v1358 = vld [vmem:[%s1326 + $0x78] sm:$0xff]
                  %1359 = vst [vmem:[%s1327 + $0x78] sm:$0xff] %v1358
                  %v1360 = vld [vmem:[%s1326 + $0x80] sm:$0xff]
                  %1361 = vst [vmem:[%s1327 + $0x80] sm:$0xff] %v1360
                  %v1362 = vld [vmem:[%s1326 + $0x88] sm:$0xff]
                  %1363 = vst [vmem:[%s1327 + $0x88] sm:$0xff] %v1362
                  %v1364 = vld [vmem:[%s1326 + $0x90] sm:$0xff]
                  %1365 = vst [vmem:[%s1327 + $0x90] sm:$0xff] %v1364
                  %v1366 = vld [vmem:[%s1326 + $0x98] sm:$0xff]
                  %1367 = vst [vmem:[%s1327 + $0x98] sm:$0xff] %v1366
                  %v1368 = vld [vmem:[%s1326 + $0xa0] sm:$0xff]
                  %1369 = vst [vmem:[%s1327 + $0xa0] sm:$0xff] %v1368
                  %v1370 = vld [vmem:[%s1326 + $0xa8] sm:$0xff]
                  %1371 = vst [vmem:[%s1327 + $0xa8] sm:$0xff] %v1370
                  %v1372 = vld [vmem:[%s1326 + $0xb0] sm:$0xff]
                  %1373 = vst [vmem:[%s1327 + $0xb0] sm:$0xff] %v1372
                  %v1374 = vld [vmem:[%s1326 + $0xb8] sm:$0xff]
                  %1375 = vst [vmem:[%s1327 + $0xb8] sm:$0xff] %v1374
                  %v1376 = vld [vmem:[%s1326 + $0xc0] sm:$0xff]
                  %1377 = vst [vmem:[%s1327 + $0xc0] sm:$0xff] %v1376
                  %v1378 = vld [vmem:[%s1326 + $0xc8] sm:$0xff]
                  %1379 = vst [vmem:[%s1327 + $0xc8] sm:$0xff] %v1378
                  %v1380 = vld [vmem:[%s1326 + $0xd0] sm:$0xff]
                  %1381 = vst [vmem:[%s1327 + $0xd0] sm:$0xff] %v1380
                  %v1382 = vld [vmem:[%s1326 + $0xd8] sm:$0xff]
                  %1383 = vst [vmem:[%s1327 + $0xd8] sm:$0xff] %v1382
                  %v1384 = vld [vmem:[%s1326 + $0xe0] sm:$0xff]
                  %1385 = vst [vmem:[%s1327 + $0xe0] sm:$0xff] %v1384
                  %v1386 = vld [vmem:[%s1326 + $0xe8] sm:$0xff]
                  %1387 = vst [vmem:[%s1327 + $0xe8] sm:$0xff] %v1386
                  %v1388 = vld [vmem:[%s1326 + $0xf0] sm:$0xff]
                  %1389 = vst [vmem:[%s1327 + $0xf0] sm:$0xff] %v1388
                  %v1390 = vld [vmem:[%s1326 + $0xf8] sm:$0xff]
                  %1391 = vst [vmem:[%s1327 + $0xf8] sm:$0xff] %v1390
                  %s1392 = sadd.s32 1, %s1325
                  %p1393 = scmp.ge.s32.totalorder %s1392, %s1318
                  %s1394 = scalar_select %p1393, 0, %s1392
                  %s1395 = smul.u32 %s1394, 256
                  %s1396 = smul.u32 %s1394, 256
                  %s1397 = scalar_lea.vmem %s1189, %s1395 [#allocation2]
                  %s1398 = scalar_lea.vmem %s1200, %s1396
                $region83: #{vib_classifier_forward.3} parent=77 // loop_footer
                  %s1322 = sadd.s32 %s1320, 1
                $region84: #{vib_classifier_forward.3} parent=77 // loop_footer_branch
                  %1319 = sbr.rel target = $region80
                $region85: #{vib_classifier_forward.3} parent=77 // loop_exit
                  _
                %s1399 = sshrl.u32 %s1196, 5
                %s1400 = sand.u32 %s1196, 31
                %s1401 = smul.u32 %s1399, 32
                %s1402 = smul.u32 8, %s1401
                %s1403 = scalar_lea.vmem %s1189, %s1402 [#allocation2]
                %s1404 = smul.u32 8, %s1401
                %s1405 = scalar_lea.vmem %s1200, %s1404
                // While loop
                $region86: #{vib_classifier_forward.3} parent=77 // loop_pre_header
                  _
                $region87: #{vib_classifier_forward.3} parent=77 // loop_header
                  %s1407 = sphi 0, %s1409
                  %p1408 = scmp.ge.s32.totalorder %s1407, %s1400
                  %s1412 = sphi 0, %s1419
                  %s1413 = sphi %s1403, %s1422
                  %s1414 = sphi %s1405, %s1423
                $region88: #{vib_classifier_forward.3} parent=77 // loop_header_branch
                  %1411 = sbr.rel (%p1408) target = $region92
                $region89: #{vib_classifier_forward.3} parent=77 // loop_body
                  %v1415 = vld [vmem:[%s1413] sm:$0xff]
                  %1416 = vst [vmem:[%s1414] sm:$0xff] %v1415
                  %s1417 = sadd.s32 1, %s1412
                  %p1418 = scmp.ge.s32.totalorder %s1417, %s1400
                  %s1419 = scalar_select %p1418, 0, %s1417
                  %s1420 = smul.u32 %s1419, 8
                  %s1421 = smul.u32 %s1419, 8
                  %s1422 = scalar_lea.vmem %s1403, %s1420 [#allocation2]
                  %s1423 = scalar_lea.vmem %s1405, %s1421
                $region90: #{vib_classifier_forward.3} parent=77 // loop_footer
                  %s1409 = sadd.s32 %s1407, 1
                $region91: #{vib_classifier_forward.3} parent=77 // loop_footer_branch
                  %1406 = sbr.rel target = $region87
                $region92: #{vib_classifier_forward.3} parent=77 // loop_exit
                  _
              $region78: #{vib_classifier_forward.3} parent=55 // pred_fallthru
                _
              // Predicated region
              $region93: #{vib_classifier_forward.3} parent=55 // pred_check
                _
              $region94: #{vib_classifier_forward.3} parent=55 // pred_check_branch
                %1425 = sbr.rel target = $region96
              $region95: #{vib_classifier_forward.3} parent=55 // pred_region
                _
              $region96: #{vib_classifier_forward.3} parent=55 // pred_fallthru
                _
            $region56: #{vib_classifier_forward.3} parent=51 // pred_fallthru
              _
            // Predicated region
            $region57: #{vib_classifier_forward.3} parent=51 // pred_check
              _
            $region58: #{vib_classifier_forward.3} parent=51 // pred_check_branch
              %1207 = sbr.rel target = $region60
            $region59: #{vib_classifier_forward.3} parent=51 // pred_region
              %s1209 = ssub.s32 256, 1
              %s1210 = sshrl.u32 %s1196, 5
              // While loop
              $region61: #{vib_classifier_forward.3} parent=59 // loop_pre_header
                _
              $region62: #{vib_classifier_forward.3} parent=59 // loop_header
                %s1212 = sphi 0, %s1214
                %p1213 = scmp.ge.s32.totalorder %s1212, %s1210
                %s1217 = sphi 0, %s1286
                %s1218 = sphi %s1189, %s1289
                %s1219 = sphi %s1200, %s1290
              $region63: #{vib_classifier_forward.3} parent=59 // loop_header_branch
                %1216 = sbr.rel (%p1213) target = $region67
              $region64: #{vib_classifier_forward.3} parent=59 // loop_body
                %v1220 = vld [vmem:[%s1218] sm:%s1209]
                %1221 = vst [vmem:[%s1219] sm:%s1209] %v1220
                %v1222 = vld [vmem:[%s1218 + $0x8] sm:%s1209]
                %1223 = vst [vmem:[%s1219 + $0x8] sm:%s1209] %v1222
                %v1224 = vld [vmem:[%s1218 + $0x10] sm:%s1209]
                %1225 = vst [vmem:[%s1219 + $0x10] sm:%s1209] %v1224
                %v1226 = vld [vmem:[%s1218 + $0x18] sm:%s1209]
                %1227 = vst [vmem:[%s1219 + $0x18] sm:%s1209] %v1226
                %v1228 = vld [vmem:[%s1218 + $0x20] sm:%s1209]
                %1229 = vst [vmem:[%s1219 + $0x20] sm:%s1209] %v1228
                %v1230 = vld [vmem:[%s1218 + $0x28] sm:%s1209]
                %1231 = vst [vmem:[%s1219 + $0x28] sm:%s1209] %v1230
                %v1232 = vld [vmem:[%s1218 + $0x30] sm:%s1209]
                %1233 = vst [vmem:[%s1219 + $0x30] sm:%s1209] %v1232
                %v1234 = vld [vmem:[%s1218 + $0x38] sm:%s1209]
                %1235 = vst [vmem:[%s1219 + $0x38] sm:%s1209] %v1234
                %v1236 = vld [vmem:[%s1218 + $0x40] sm:%s1209]
                %1237 = vst [vmem:[%s1219 + $0x40] sm:%s1209] %v1236
                %v1238 = vld [vmem:[%s1218 + $0x48] sm:%s1209]
                %1239 = vst [vmem:[%s1219 + $0x48] sm:%s1209] %v1238
                %v1240 = vld [vmem:[%s1218 + $0x50] sm:%s1209]
                %1241 = vst [vmem:[%s1219 + $0x50] sm:%s1209] %v1240
                %v1242 = vld [vmem:[%s1218 + $0x58] sm:%s1209]
                %1243 = vst [vmem:[%s1219 + $0x58] sm:%s1209] %v1242
                %v1244 = vld [vmem:[%s1218 + $0x60] sm:%s1209]
                %1245 = vst [vmem:[%s1219 + $0x60] sm:%s1209] %v1244
                %v1246 = vld [vmem:[%s1218 + $0x68] sm:%s1209]
                %1247 = vst [vmem:[%s1219 + $0x68] sm:%s1209] %v1246
                %v1248 = vld [vmem:[%s1218 + $0x70] sm:%s1209]
                %1249 = vst [vmem:[%s1219 + $0x70] sm:%s1209] %v1248
                %v1250 = vld [vmem:[%s1218 + $0x78] sm:%s1209]
                %1251 = vst [vmem:[%s1219 + $0x78] sm:%s1209] %v1250
                %v1252 = vld [vmem:[%s1218 + $0x80] sm:%s1209]
                %1253 = vst [vmem:[%s1219 + $0x80] sm:%s1209] %v1252
                %v1254 = vld [vmem:[%s1218 + $0x88] sm:%s1209]
                %1255 = vst [vmem:[%s1219 + $0x88] sm:%s1209] %v1254
                %v1256 = vld [vmem:[%s1218 + $0x90] sm:%s1209]
                %1257 = vst [vmem:[%s1219 + $0x90] sm:%s1209] %v1256
                %v1258 = vld [vmem:[%s1218 + $0x98] sm:%s1209]
                %1259 = vst [vmem:[%s1219 + $0x98] sm:%s1209] %v1258
                %v1260 = vld [vmem:[%s1218 + $0xa0] sm:%s1209]
                %1261 = vst [vmem:[%s1219 + $0xa0] sm:%s1209] %v1260
                %v1262 = vld [vmem:[%s1218 + $0xa8] sm:%s1209]
                %1263 = vst [vmem:[%s1219 + $0xa8] sm:%s1209] %v1262
                %v1264 = vld [vmem:[%s1218 + $0xb0] sm:%s1209]
                %1265 = vst [vmem:[%s1219 + $0xb0] sm:%s1209] %v1264
                %v1266 = vld [vmem:[%s1218 + $0xb8] sm:%s1209]
                %1267 = vst [vmem:[%s1219 + $0xb8] sm:%s1209] %v1266
                %v1268 = vld [vmem:[%s1218 + $0xc0] sm:%s1209]
                %1269 = vst [vmem:[%s1219 + $0xc0] sm:%s1209] %v1268
                %v1270 = vld [vmem:[%s1218 + $0xc8] sm:%s1209]
                %1271 = vst [vmem:[%s1219 + $0xc8] sm:%s1209] %v1270
                %v1272 = vld [vmem:[%s1218 + $0xd0] sm:%s1209]
                %1273 = vst [vmem:[%s1219 + $0xd0] sm:%s1209] %v1272
                %v1274 = vld [vmem:[%s1218 + $0xd8] sm:%s1209]
                %1275 = vst [vmem:[%s1219 + $0xd8] sm:%s1209] %v1274
                %v1276 = vld [vmem:[%s1218 + $0xe0] sm:%s1209]
                %1277 = vst [vmem:[%s1219 + $0xe0] sm:%s1209] %v1276
                %v1278 = vld [vmem:[%s1218 + $0xe8] sm:%s1209]
                %1279 = vst [vmem:[%s1219 + $0xe8] sm:%s1209] %v1278
                %v1280 = vld [vmem:[%s1218 + $0xf0] sm:%s1209]
                %1281 = vst [vmem:[%s1219 + $0xf0] sm:%s1209] %v1280
                %v1282 = vld [vmem:[%s1218 + $0xf8] sm:%s1209]
                %1283 = vst [vmem:[%s1219 + $0xf8] sm:%s1209] %v1282
                %s1284 = sadd.s32 1, %s1217
                %p1285 = scmp.ge.s32.totalorder %s1284, %s1210
                %s1286 = scalar_select %p1285, 0, %s1284
                %s1287 = smul.u32 %s1286, 256
                %s1288 = smul.u32 %s1286, 256
                %s1289 = scalar_lea.vmem %s1189, %s1287 [#allocation2]
                %s1290 = scalar_lea.vmem %s1200, %s1288
              $region65: #{vib_classifier_forward.3} parent=59 // loop_footer
                %s1214 = sadd.s32 %s1212, 1
              $region66: #{vib_classifier_forward.3} parent=59 // loop_footer_branch
                %1211 = sbr.rel target = $region62
              $region67: #{vib_classifier_forward.3} parent=59 // loop_exit
                _
              %s1291 = sshrl.u32 %s1196, 5
              %s1292 = sand.u32 %s1196, 31
              %s1293 = smul.u32 %s1291, 32
              %s1294 = smul.u32 8, %s1293
              %s1295 = scalar_lea.vmem %s1189, %s1294 [#allocation2]
              %s1296 = smul.u32 8, %s1293
              %s1297 = scalar_lea.vmem %s1200, %s1296
              // While loop
              $region68: #{vib_classifier_forward.3} parent=59 // loop_pre_header
                _
              $region69: #{vib_classifier_forward.3} parent=59 // loop_header
                %s1299 = sphi 0, %s1301
                %p1300 = scmp.ge.s32.totalorder %s1299, %s1292
                %s1304 = sphi 0, %s1311
                %s1305 = sphi %s1295, %s1314
                %s1306 = sphi %s1297, %s1315
              $region70: #{vib_classifier_forward.3} parent=59 // loop_header_branch
                %1303 = sbr.rel (%p1300) target = $region74
              $region71: #{vib_classifier_forward.3} parent=59 // loop_body
                %v1307 = vld [vmem:[%s1305] sm:%s1209]
                %1308 = vst [vmem:[%s1306] sm:%s1209] %v1307
                %s1309 = sadd.s32 1, %s1304
                %p1310 = scmp.ge.s32.totalorder %s1309, %s1292
                %s1311 = scalar_select %p1310, 0, %s1309
                %s1312 = smul.u32 %s1311, 8
                %s1313 = smul.u32 %s1311, 8
                %s1314 = scalar_lea.vmem %s1295, %s1312 [#allocation2]
                %s1315 = scalar_lea.vmem %s1297, %s1313
              $region72: #{vib_classifier_forward.3} parent=59 // loop_footer
                %s1301 = sadd.s32 %s1299, 1
              $region73: #{vib_classifier_forward.3} parent=59 // loop_footer_branch
                %1298 = sbr.rel target = $region69
              $region74: #{vib_classifier_forward.3} parent=59 // loop_exit
                _
            $region60: #{vib_classifier_forward.3} parent=51 // pred_fallthru
              _
          $region52: #{vib_classifier_forward.3} parent=47 // pred_fallthru
            _
          %1426 = vnop
        $region48: #{vib_classifier_forward.3} parent=43 // pred_fallthru
          _
      $region44: #{vib_classifier_forward.3} parent=5 // pred_fallthru
        _
      %p1427 = scmp.le.s32.totalorder 2, %s12
      // Predicated region
      $region97: #{vib_classifier_forward.3} parent=5 // pred_check
        %p1428 = pneg %p1427
      $region98: #{vib_classifier_forward.3} parent=5 // pred_check_branch
        %1430 = sbr.rel (%p1428) target = $region100
      $region99: #{vib_classifier_forward.3} parent=5 // pred_region
        %s1431 = ssub.s32 %s12, 2
        // Predicated region
        $region101: #{vib_classifier_forward.3} parent=99 // pred_check
          %p1432 = pneg %p172
        $region102: #{vib_classifier_forward.3} parent=99 // pred_check_branch
          %1434 = sbr.rel (%p1432) target = $region104
        $region103: #{vib_classifier_forward.3} parent=99 // pred_region
          %s1435 = sand.u32 %s157, 1
          %s1436 = sand.u32 %s157, 1
          %s1437 = smul.addr %s1436, 512
          %s1438 = scalar_lea.vmem [#allocation2], %s1437
        $region104: #{vib_classifier_forward.3} parent=99 // pred_fallthru
          _
      $region100: #{vib_classifier_forward.3} parent=5 // pred_fallthru
        _
    $region6: #{vib_classifier_forward.3} parent=1 // loop_footer
      %s16 = sadd.s32 1, %s12
    $region7: #{vib_classifier_forward.3} parent=1 // loop_footer_branch
      %11 = sbr.rel target = $region3
    $region8: #{vib_classifier_forward.3} parent=1 // loop_exit
      _

// kernel: vib_classifier_forward.2
$region0: #{vib_classifier_forward.2}
  #allocation0 [shape = 'u32[]', space=smem, size = 0x4, offset = 0x4, fixed_abs, tag = 'smem constant byte address 0x4 - core index']
  #allocation1 [shape = 'u32[72,128]{1,0:T(1,128)}', space=vmem, size = 0x9000, scoped, tag = 'internal scratch']
  %s0 = inlined_call_operand.vmem [shape: f32[1000,32], index: 0, kind: input, shape index: {}]
  %s1 = inlined_call_operand.vmem [shape: bf16[32,128], index: 1, kind: input, shape index: {}]
  %s2 = inlined_call_operand.vmem [shape: f32[2,1,128], index: 2, kind: output, shape index: {0}]
  %s3 = inlined_call_operand.vmem [shape: f32[2,1,128], index: 3, kind: output, shape index: {1}]
  %4 = xla_tuple %s2, %s3
  %s5 = sld [smem:[#allocation0]]
  $region49: #{vib_classifier_forward.2} parent=0
    _
  %s7 = ssub.s32 1, %s5
  %s8 = scalar_select 0, %s7, %s5
  loop: start=0, step=1, limit=4
  $region2: #{vib_classifier_forward.2} parent=0 // loop_pre_header
    _
  $region3: #{vib_classifier_forward.2} parent=0 // loop_header
    %s10 = sphi 0, %s14
    %p11 = scmp.ge.s32.totalorder %s10, 4
    %s20 = sphi 0, %s22
    %s23 = sphi 0, %s20
    %s24 = sphi 0, %s23
    %s40 = sphi 0, %s24
    %s44 = sphi 0, %s44
    %s46 = sphi 0, %s44
    %s47 = sphi 0, %s46
    %s61 = sphi 0, %s47
    %s67 = sphi 0, %s69
    %s70 = sphi 0, %s67
    %s71 = sphi 0, %s70
    %s87 = sphi 0, %s71
    %s93 = sphi 0, %s95
    %s96 = sphi 0, %s93
    %s97 = sphi 0, %s96
    %s113 = sphi 0, %s97
  $region4: #{vib_classifier_forward.2} parent=0 // loop_header_branch
    %13 = sbr.rel (%p11) target = $region8
  $region5: #{vib_classifier_forward.2} parent=0 // loop_body
    %s15 = ssub.s32 %s10, 1
    %s16 = ssub.s32 %s10, 2
    %s17 = sadd.s32 %s10, 1
    %s18 = ssub.s32 %s10, %s17
    %p19 = scmp.eq.s32.totalorder %s18, 0
    %s21 = sadd.s32 %s20, 1
    %s22 = scalar_select %p19, %s20, %s21
    %p25 = pneg %p19
    %p26 = scmp.eq.s32.totalorder %s10, 1
    %p27 = por %p25, %p26
    %p28 = scmp.ne.s32.totalorder %s20, %s23
    %p29 = scmp.eq.s32.totalorder %s10, 0
    %p30 = por %p28, %p29
    %p31 = scmp.ne.s32.totalorder %s20, %s23
    %p32 = scmp.eq.s32.totalorder %s15, 1
    %p33 = por %p31, %p32
    %p34 = scmp.ne.s32.totalorder %s23, %s24
    %p35 = scmp.eq.s32.totalorder %s15, 0
    %p36 = por %p34, %p35
    %p37 = scmp.ne.s32.totalorder %s23, %s24
    %p38 = scmp.eq.s32.totalorder %s16, 1
    %p39 = por %p37, %p38
    %p41 = scmp.ne.s32.totalorder %s24, %s40
    %p42 = scmp.eq.s32.totalorder %s16, 0
    %p43 = por %p41, %p42
    %s45 = sadd.s32 %s44, 1
    %p48 = scmp.eq.s32.totalorder %s10, 1
    %p49 = scmp.ne.s32.totalorder %s44, %s46
    %p50 = scmp.eq.s32.totalorder %s10, 0
    %p51 = por %p49, %p50
    %p52 = scmp.ne.s32.totalorder %s44, %s46
    %p53 = scmp.eq.s32.totalorder %s15, 1
    %p54 = por %p52, %p53
    %p55 = scmp.ne.s32.totalorder %s46, %s47
    %p56 = scmp.eq.s32.totalorder %s15, 0
    %p57 = por %p55, %p56
    %p58 = scmp.ne.s32.totalorder %s46, %s47
    %p59 = scmp.eq.s32.totalorder %s16, 1
    %p60 = por %p58, %p59
    %p62 = scmp.ne.s32.totalorder %s47, %s61
    %p63 = scmp.eq.s32.totalorder %s16, 0
    %p64 = por %p62, %p63
    %s65 = ssub.s32 %s10, %s17
    %p66 = scmp.eq.s32.totalorder %s65, 0
    %s68 = sadd.s32 %s67, 1
    %s69 = scalar_select %p66, %s67, %s68
    %p72 = pneg %p66
    %p73 = scmp.eq.s32.totalorder %s10, 1
    %p74 = por %p72, %p73
    %p75 = scmp.ne.s32.totalorder %s67, %s70
    %p76 = scmp.eq.s32.totalorder %s10, 0
    %p77 = por %p75, %p76
    %p78 = scmp.ne.s32.totalorder %s67, %s70
    %p79 = scmp.eq.s32.totalorder %s15, 1
    %p80 = por %p78, %p79
    %p81 = scmp.ne.s32.totalorder %s70, %s71
    %p82 = scmp.eq.s32.totalorder %s15, 0
    %p83 = por %p81, %p82
    %p84 = scmp.ne.s32.totalorder %s70, %s71
    %p85 = scmp.eq.s32.totalorder %s16, 1
    %p86 = por %p84, %p85
    %p88 = scmp.ne.s32.totalorder %s71, %s87
    %p89 = scmp.eq.s32.totalorder %s16, 0
    %p90 = por %p88, %p89
    %s91 = ssub.s32 %s10, %s17
    %p92 = scmp.eq.s32.totalorder %s91, 0
    %s94 = sadd.s32 %s93, 1
    %s95 = scalar_select %p92, %s93, %s94
    %p98 = pneg %p92
    %p99 = scmp.eq.s32.totalorder %s10, 1
    %p100 = por %p98, %p99
    %p101 = scmp.ne.s32.totalorder %s93, %s96
    %p102 = scmp.eq.s32.totalorder %s10, 0
    %p103 = por %p101, %p102
    %p104 = scmp.ne.s32.totalorder %s93, %s96
    %p105 = scmp.eq.s32.totalorder %s15, 1
    %p106 = por %p104, %p105
    %p107 = scmp.ne.s32.totalorder %s96, %s97
    %p108 = scmp.eq.s32.totalorder %s15, 0
    %p109 = por %p107, %p108
    %p110 = scmp.ne.s32.totalorder %s96, %s97
    %p111 = scmp.eq.s32.totalorder %s16, 1
    %p112 = por %p110, %p111
    %p114 = scmp.ne.s32.totalorder %s97, %s113
    %p115 = scmp.eq.s32.totalorder %s16, 0
    %p116 = por %p114, %p115
    %p117 = scmp.le.s32.totalorder 1, %s10
    %p118 = scmp.lt.s32.totalorder %s10, 3
    %p119 = pnand %p117, %p118
    %p120 = pneg %p119
    // Predicated region
    $region9: #{vib_classifier_forward.2} parent=5 // pred_check
      _
    $region10: #{vib_classifier_forward.2} parent=5 // pred_check_branch
      %122 = sbr.rel (%p119) target = $region12
    $region11: #{vib_classifier_forward.2} parent=5 // pred_region
      %s123 = ssub.s32 %s10, 1
      // Predicated region
      $region13: #{vib_classifier_forward.2} parent=11 // pred_check
        %p124 = pneg %p57
      $region14: #{vib_classifier_forward.2} parent=11 // pred_check_branch
        %126 = sbr.rel (%p124) target = $region16
      $region15: #{vib_classifier_forward.2} parent=11 // pred_region
        _
      $region16: #{vib_classifier_forward.2} parent=11 // pred_fallthru
        _
    $region12: #{vib_classifier_forward.2} parent=5 // pred_fallthru
      _
    %p127 = scmp.lt.s32.totalorder %s10, 2
    // Predicated region
    $region17: #{vib_classifier_forward.2} parent=5 // pred_check
      %p128 = pneg %p127
    $region18: #{vib_classifier_forward.2} parent=5 // pred_check_branch
      %130 = sbr.rel (%p128) target = $region20
    $region19: #{vib_classifier_forward.2} parent=5 // pred_region
      // Predicated region
      $region21: #{vib_classifier_forward.2} parent=19 // pred_check
        %p131 = pneg %p30
      $region22: #{vib_classifier_forward.2} parent=19 // pred_check_branch
        %133 = sbr.rel (%p131) target = $region24
      $region23: #{vib_classifier_forward.2} parent=19 // pred_region
        %s134 = smul.u32 64, %s10
        %s135 = ssub.s32 125, %s134
        %p136 = scmp.lt.s32.totalorder %s135, 64
        %s137 = scalar_select %p136, %s135, 64
        %s138 = smul.u32 8, %s137
        %p139 = scmp.lt.s32.totalorder %s134, 124
        %s140 = scalar_select %p139, %s134, 124
        %s141 = smul.addr %s140, 8
        %s142 = scalar_lea.vmem %s0, %s141
        %s143 = smul.u32 64, %s10
        %s144 = ssub.s32 125, %s143
        %p145 = scmp.lt.s32.totalorder %s144, 64
        %s146 = scalar_select %p145, %s144, 64
        %s147 = smul.u32 8, %s146
      $region24: #{vib_classifier_forward.2} parent=19 // pred_fallthru
        _
    $region20: #{vib_classifier_forward.2} parent=5 // pred_fallthru
      _
    %p148 = scmp.le.s32.totalorder 1, %s10
    %p149 = scmp.lt.s32.totalorder %s10, 3
    %p150 = pnand %p148, %p149
    %p151 = pneg %p150
    // Predicated region
    $region25: #{vib_classifier_forward.2} parent=5 // pred_check
      _
    $region26: #{vib_classifier_forward.2} parent=5 // pred_check_branch
      %153 = sbr.rel (%p150) target = $region28
    $region27: #{vib_classifier_forward.2} parent=5 // pred_region
      %s154 = ssub.s32 %s10, 1
      %s155 = smul.u32 64, %s15
      %s156 = ssub.s32 125, %s155
      %p157 = scmp.lt.s32.totalorder %s156, 64
      %s158 = scalar_select %p157, %s156, 64
      %s159 = smul.u32 8, %s158
      %p160 = scmp.lt.s32.totalorder %s155, 124
      %s161 = scalar_select %p160, %s155, 124
      %s162 = smul.addr %s161, 8
      %s163 = scalar_lea.vmem %s0, %s162
      %p164 = pneg %p36
      %p165 = pneg %p33
      %p166 = pneg %p57
      %p167 = pneg %p54
      %p168 = pneg %p83
      %p169 = pneg %p80
      %p170 = scmp.lt.s32.totalorder %s15, 1
      %s171 = scalar_select %p170, %s15, 1
      %s172 = scalar_lea.vmem %s2, %s171
      %p173 = pneg %p109
      %p174 = pneg %p106
      %p175 = scmp.lt.s32.totalorder %s15, 1
      %s176 = scalar_select %p175, %s15, 1
      %s177 = scalar_lea.vmem %s3, %s176
      %s178 = smul.u32 64, %s15
      %s179 = ssub.s32 125, %s178
      %p180 = scmp.lt.s32.totalorder %s179, 64
      %s181 = scalar_select %p180, %s179, 64
      %s182 = smul.u32 8, %s181
      %p183 = scmp.lt.s32.totalorder %s178, 124
      %s184 = scalar_select %p183, %s178, 124
      %s185 = smul.addr %s184, 8
      %s186 = scalar_lea.vmem %s0, %s185
      %s187 = smul.u32 64, %s15
      %s188 = ssub.s32 125, %s187
      %p189 = scmp.lt.s32.totalorder %s188, 64
      %s190 = scalar_select %p189, %s188, 64
      %s191 = smul.u32 8, %s190
      %p192 = scmp.lt.s32.totalorder %s15, 1
      %s193 = scalar_select %p192, %s15, 1
      %s194 = scalar_lea.vmem %s2, %s193
      %p195 = scmp.lt.s32.totalorder %s15, 1
      %s196 = scalar_select %p195, %s15, 1
      %s197 = scalar_lea.vmem %s3, %s196
      %v199 = vlaneseq
      %v200 = vshrl.u32 %v199, 7
      %v201 = vadd.s32 %v200, 8
      %v202 = vadd.s32 %v200, 16
      %v203 = vadd.s32 %v200, 24
      %v204 = vadd.s32 %v200, 32
      %v205 = vadd.s32 %v200, 40
      %v206 = vadd.s32 %v200, 48
      %v207 = vadd.s32 %v200, 56
      %v208 = vadd.s32 %v200, 64
      %v209 = vadd.s32 %v200, 72
      %v210 = vadd.s32 %v200, 80
      %v211 = vadd.s32 %v200, 88
      %v212 = vadd.s32 %v200, 96
      %v213 = vadd.s32 %v200, 104
      %v214 = vadd.s32 %v200, 112
      %v215 = vadd.s32 %v200, 120
      %v216 = vadd.s32 %v200, 128
      %v217 = vadd.s32 %v200, 136
      %v218 = vadd.s32 %v200, 144
      %v219 = vadd.s32 %v200, 152
      %v220 = vadd.s32 %v200, 160
      %v221 = vadd.s32 %v200, 168
      %v222 = vadd.s32 %v200, 176
      %v223 = vadd.s32 %v200, 184
      %v224 = vadd.s32 %v200, 192
      %v225 = vadd.s32 %v200, 200
      %v226 = vadd.s32 %v200, 208
      %v227 = vadd.s32 %v200, 216
      %v228 = vadd.s32 %v200, 224
      %v229 = vadd.s32 %v200, 232
      %v230 = vadd.s32 %v200, 240
      %v231 = vadd.s32 %v200, 248
      %v232 = vadd.s32 %v200, 256
      %v233 = vadd.s32 %v200, 264
      %v234 = vadd.s32 %v200, 272
      %v235 = vadd.s32 %v200, 280
      %v236 = vadd.s32 %v200, 288
      %v237 = vadd.s32 %v200, 296
      %v238 = vadd.s32 %v200, 304
      %v239 = vadd.s32 %v200, 312
      %v240 = vadd.s32 %v200, 320
      %v241 = vadd.s32 %v200, 328
      %v242 = vadd.s32 %v200, 336
      %v243 = vadd.s32 %v200, 344
      %v244 = vadd.s32 %v200, 352
      %v245 = vadd.s32 %v200, 360
      %v246 = vadd.s32 %v200, 368
      %v247 = vadd.s32 %v200, 376
      %v248 = vadd.s32 %v200, 384
      %v249 = vadd.s32 %v200, 392
      %v250 = vadd.s32 %v200, 400
      %v251 = vadd.s32 %v200, 408
      %v252 = vadd.s32 %v200, 416
      %v253 = vadd.s32 %v200, 424
      %v254 = vadd.s32 %v200, 432
      %v255 = vadd.s32 %v200, 440
      %v256 = vadd.s32 %v200, 448
      %v257 = vadd.s32 %v200, 456
      %v258 = vadd.s32 %v200, 464
      %v259 = vadd.s32 %v200, 472
      %v260 = vadd.s32 %v200, 480
      %v261 = vadd.s32 %v200, 488
      %v262 = vadd.s32 %v200, 496
      %v263 = vadd.s32 %v200, 504
      %s264 = smul.u32 %s15, 512
      %v265 = vstv %s264
      %v266 = vadd.s32 %v200, %v265
      %v267 = vadd.s32 %v201, %v265
      %v268 = vadd.s32 %v202, %v265
      %v269 = vadd.s32 %v203, %v265
      %v270 = vadd.s32 %v204, %v265
      %v271 = vadd.s32 %v205, %v265
      %v272 = vadd.s32 %v206, %v265
      %v273 = vadd.s32 %v207, %v265
      %v274 = vadd.s32 %v208, %v265
      %v275 = vadd.s32 %v209, %v265
      %v276 = vadd.s32 %v210, %v265
      %v277 = vadd.s32 %v211, %v265
      %v278 = vadd.s32 %v212, %v265
      %v279 = vadd.s32 %v213, %v265
      %v280 = vadd.s32 %v214, %v265
      %v281 = vadd.s32 %v215, %v265
      %v282 = vadd.s32 %v216, %v265
      %v283 = vadd.s32 %v217, %v265
      %v284 = vadd.s32 %v218, %v265
      %v285 = vadd.s32 %v219, %v265
      %v286 = vadd.s32 %v220, %v265
      %v287 = vadd.s32 %v221, %v265
      %v288 = vadd.s32 %v222, %v265
      %v289 = vadd.s32 %v223, %v265
      %v290 = vadd.s32 %v224, %v265
      %v291 = vadd.s32 %v225, %v265
      %v292 = vadd.s32 %v226, %v265
      %v293 = vadd.s32 %v227, %v265
      %v294 = vadd.s32 %v228, %v265
      %v295 = vadd.s32 %v229, %v265
      %v296 = vadd.s32 %v230, %v265
      %v297 = vadd.s32 %v231, %v265
      %v298 = vadd.s32 %v232, %v265
      %v299 = vadd.s32 %v233, %v265
      %v300 = vadd.s32 %v234, %v265
      %v301 = vadd.s32 %v235, %v265
      %v302 = vadd.s32 %v236, %v265
      %v303 = vadd.s32 %v237, %v265
      %v304 = vadd.s32 %v238, %v265
      %v305 = vadd.s32 %v239, %v265
      %v306 = vadd.s32 %v240, %v265
      %v307 = vadd.s32 %v241, %v265
      %v308 = vadd.s32 %v242, %v265
      %v309 = vadd.s32 %v243, %v265
      %v310 = vadd.s32 %v244, %v265
      %v311 = vadd.s32 %v245, %v265
      %v312 = vadd.s32 %v246, %v265
      %v313 = vadd.s32 %v247, %v265
      %v314 = vadd.s32 %v248, %v265
      %v315 = vadd.s32 %v249, %v265
      %v316 = vadd.s32 %v250, %v265
      %v317 = vadd.s32 %v251, %v265
      %v318 = vadd.s32 %v252, %v265
      %v319 = vadd.s32 %v253, %v265
      %v320 = vadd.s32 %v254, %v265
      %v321 = vadd.s32 %v255, %v265
      %v322 = vadd.s32 %v256, %v265
      %v323 = vadd.s32 %v257, %v265
      %v324 = vadd.s32 %v258, %v265
      %v325 = vadd.s32 %v259, %v265
      %v326 = vadd.s32 %v260, %v265
      %v327 = vadd.s32 %v261, %v265
      %v328 = vadd.s32 %v262, %v265
      %v329 = vadd.s32 %v263, %v265
      %vm330 = vcmp.lt.s32.totalorder %v266, 1000
      %vm331 = vcmp.lt.s32.totalorder %v267, 1000
      %vm332 = vcmp.lt.s32.totalorder %v268, 1000
      %vm333 = vcmp.lt.s32.totalorder %v269, 1000
      %vm334 = vcmp.lt.s32.totalorder %v270, 1000
      %vm335 = vcmp.lt.s32.totalorder %v271, 1000
      %vm336 = vcmp.lt.s32.totalorder %v272, 1000
      %vm337 = vcmp.lt.s32.totalorder %v273, 1000
      %vm338 = vcmp.lt.s32.totalorder %v274, 1000
      %vm339 = vcmp.lt.s32.totalorder %v275, 1000
      %vm340 = vcmp.lt.s32.totalorder %v276, 1000
      %vm341 = vcmp.lt.s32.totalorder %v277, 1000
      %vm342 = vcmp.lt.s32.totalorder %v278, 1000
      %vm343 = vcmp.lt.s32.totalorder %v279, 1000
      %vm344 = vcmp.lt.s32.totalorder %v280, 1000
      %vm345 = vcmp.lt.s32.totalorder %v281, 1000
      %vm346 = vcmp.lt.s32.totalorder %v282, 1000
      %vm347 = vcmp.lt.s32.totalorder %v283, 1000
      %vm348 = vcmp.lt.s32.totalorder %v284, 1000
      %vm349 = vcmp.lt.s32.totalorder %v285, 1000
      %vm350 = vcmp.lt.s32.totalorder %v286, 1000
      %vm351 = vcmp.lt.s32.totalorder %v287, 1000
      %vm352 = vcmp.lt.s32.totalorder %v288, 1000
      %vm353 = vcmp.lt.s32.totalorder %v289, 1000
      %vm354 = vcmp.lt.s32.totalorder %v290, 1000
      %vm355 = vcmp.lt.s32.totalorder %v291, 1000
      %vm356 = vcmp.lt.s32.totalorder %v292, 1000
      %vm357 = vcmp.lt.s32.totalorder %v293, 1000
      %vm358 = vcmp.lt.s32.totalorder %v294, 1000
      %vm359 = vcmp.lt.s32.totalorder %v295, 1000
      %vm360 = vcmp.lt.s32.totalorder %v296, 1000
      %vm361 = vcmp.lt.s32.totalorder %v297, 1000
      %vm362 = vcmp.lt.s32.totalorder %v298, 1000
      %vm363 = vcmp.lt.s32.totalorder %v299, 1000
      %vm364 = vcmp.lt.s32.totalorder %v300, 1000
      %vm365 = vcmp.lt.s32.totalorder %v301, 1000
      %vm366 = vcmp.lt.s32.totalorder %v302, 1000
      %vm367 = vcmp.lt.s32.totalorder %v303, 1000
      %vm368 = vcmp.lt.s32.totalorder %v304, 1000
      %vm369 = vcmp.lt.s32.totalorder %v305, 1000
      %vm370 = vcmp.lt.s32.totalorder %v306, 1000
      %vm371 = vcmp.lt.s32.totalorder %v307, 1000
      %vm372 = vcmp.lt.s32.totalorder %v308, 1000
      %vm373 = vcmp.lt.s32.totalorder %v309, 1000
      %vm374 = vcmp.lt.s32.totalorder %v310, 1000
      %vm375 = vcmp.lt.s32.totalorder %v311, 1000
      %vm376 = vcmp.lt.s32.totalorder %v312, 1000
      %vm377 = vcmp.lt.s32.totalorder %v313, 1000
      %vm378 = vcmp.lt.s32.totalorder %v314, 1000
      %vm379 = vcmp.lt.s32.totalorder %v315, 1000
      %vm380 = vcmp.lt.s32.totalorder %v316, 1000
      %vm381 = vcmp.lt.s32.totalorder %v317, 1000
      %vm382 = vcmp.lt.s32.totalorder %v318, 1000
      %vm383 = vcmp.lt.s32.totalorder %v319, 1000
      %vm384 = vcmp.lt.s32.totalorder %v320, 1000
      %vm385 = vcmp.lt.s32.totalorder %v321, 1000
      %vm386 = vcmp.lt.s32.totalorder %v322, 1000
      %vm387 = vcmp.lt.s32.totalorder %v323, 1000
      %vm388 = vcmp.lt.s32.totalorder %v324, 1000
      %vm389 = vcmp.lt.s32.totalorder %v325, 1000
      %vm390 = vcmp.lt.s32.totalorder %v326, 1000
      %vm391 = vcmp.lt.s32.totalorder %v327, 1000
      %vm392 = vcmp.lt.s32.totalorder %v328, 1000
      %vm393 = vcmp.lt.s32.totalorder %v329, 1000
      %v394 = vld [vmem:[%s186] sm:$0xff]
      %v395 = vld [vmem:[%s186 + $0x8] sm:$0xff]
      %v396 = vld [vmem:[%s186 + $0x10] sm:$0xff]
      %v397 = vld [vmem:[%s186 + $0x18] sm:$0xff]
      %v398 = vld [vmem:[%s186 + $0x20] sm:$0xff]
      %v399 = vld [vmem:[%s186 + $0x28] sm:$0xff]
      %v400 = vld [vmem:[%s186 + $0x30] sm:$0xff]
      %v401 = vld [vmem:[%s186 + $0x38] sm:$0xff]
      %v402 = vld [vmem:[%s186 + $0x40] sm:$0xff]
      %v403 = vld [vmem:[%s186 + $0x48] sm:$0xff]
      %v404 = vld [vmem:[%s186 + $0x50] sm:$0xff]
      %v405 = vld [vmem:[%s186 + $0x58] sm:$0xff]
      %v406 = vld [vmem:[%s186 + $0x60] sm:$0xff]
      %v407 = vld [vmem:[%s186 + $0x68] sm:$0xff]
      %v408 = vld [vmem:[%s186 + $0x70] sm:$0xff]
      %v409 = vld [vmem:[%s186 + $0x78] sm:$0xff]
      %v410 = vld [vmem:[%s186 + $0x80] sm:$0xff]
      %v411 = vld [vmem:[%s186 + $0x88] sm:$0xff]
      %v412 = vld [vmem:[%s186 + $0x90] sm:$0xff]
      %v413 = vld [vmem:[%s186 + $0x98] sm:$0xff]
      %v414 = vld [vmem:[%s186 + $0xa0] sm:$0xff]
      %v415 = vld [vmem:[%s186 + $0xa8] sm:$0xff]
      %v416 = vld [vmem:[%s186 + $0xb0] sm:$0xff]
      %v417 = vld [vmem:[%s186 + $0xb8] sm:$0xff]
      %v418 = vld [vmem:[%s186 + $0xc0] sm:$0xff]
      %v419 = vld [vmem:[%s186 + $0xc8] sm:$0xff]
      %v420 = vld [vmem:[%s186 + $0xd0] sm:$0xff]
      %v421 = vld [vmem:[%s186 + $0xd8] sm:$0xff]
      %v422 = vld [vmem:[%s186 + $0xe0] sm:$0xff]
      %v423 = vld [vmem:[%s186 + $0xe8] sm:$0xff]
      %v424 = vld [vmem:[%s186 + $0xf0] sm:$0xff]
      %v425 = vld [vmem:[%s186 + $0xf8] sm:$0xff]
      %v426 = vld [vmem:[%s186 + $0x100] sm:$0xff]
      %v427 = vld [vmem:[%s186 + $0x108] sm:$0xff]
      %v428 = vld [vmem:[%s186 + $0x110] sm:$0xff]
      %v429 = vld [vmem:[%s186 + $0x118] sm:$0xff]
      %v430 = vld [vmem:[%s186 + $0x120] sm:$0xff]
      %v431 = vld [vmem:[%s186 + $0x128] sm:$0xff]
      %v432 = vld [vmem:[%s186 + $0x130] sm:$0xff]
      %v433 = vld [vmem:[%s186 + $0x138] sm:$0xff]
      %v434 = vld [vmem:[%s186 + $0x140] sm:$0xff]
      %v435 = vld [vmem:[%s186 + $0x148] sm:$0xff]
      %v436 = vld [vmem:[%s186 + $0x150] sm:$0xff]
      %v437 = vld [vmem:[%s186 + $0x158] sm:$0xff]
      %v438 = vld [vmem:[%s186 + $0x160] sm:$0xff]
      %v439 = vld [vmem:[%s186 + $0x168] sm:$0xff]
      %v440 = vld [vmem:[%s186 + $0x170] sm:$0xff]
      %v441 = vld [vmem:[%s186 + $0x178] sm:$0xff]
      %v442 = vld [vmem:[%s186 + $0x180] sm:$0xff]
      %v443 = vld [vmem:[%s186 + $0x188] sm:$0xff]
      %v444 = vld [vmem:[%s186 + $0x190] sm:$0xff]
      %v445 = vld [vmem:[%s186 + $0x198] sm:$0xff]
      %v446 = vld [vmem:[%s186 + $0x1a0] sm:$0xff]
      %v447 = vld [vmem:[%s186 + $0x1a8] sm:$0xff]
      %v448 = vld [vmem:[%s186 + $0x1b0] sm:$0xff]
      %v449 = vld [vmem:[%s186 + $0x1b8] sm:$0xff]
      %v450 = vld [vmem:[%s186 + $0x1c0] sm:$0xff]
      %v451 = vld [vmem:[%s186 + $0x1c8] sm:$0xff]
      %v452 = vld [vmem:[%s186 + $0x1d0] sm:$0xff]
      %v453 = vld [vmem:[%s186 + $0x1d8] sm:$0xff]
      %v454 = vld [vmem:[%s186 + $0x1e0] sm:$0xff]
      %v455 = vld [vmem:[%s186 + $0x1e8] sm:$0xff]
      %v456 = vld [vmem:[%s186 + $0x1f0] sm:$0xff]
      %v457 = vld [vmem:[%s186 + $0x1f8] sm:$0xff]
      %v458 = vsel %vm330, 1, 0
      %v459 = vsel %vm331, 1, 0
      %v460 = vsel %vm332, 1, 0
      %v461 = vsel %vm333, 1, 0
      %v462 = vsel %vm334, 1, 0
      %v463 = vsel %vm335, 1, 0
      %v464 = vsel %vm336, 1, 0
      %v465 = vsel %vm337, 1, 0
      %v466 = vsel %vm338, 1, 0
      %v467 = vsel %vm339, 1, 0
      %v468 = vsel %vm340, 1, 0
      %v469 = vsel %vm341, 1, 0
      %v470 = vsel %vm342, 1, 0
      %v471 = vsel %vm343, 1, 0
      %v472 = vsel %vm344, 1, 0
      %v473 = vsel %vm345, 1, 0
      %v474 = vsel %vm346, 1, 0
      %v475 = vsel %vm347, 1, 0
      %v476 = vsel %vm348, 1, 0
      %v477 = vsel %vm349, 1, 0
      %v478 = vsel %vm350, 1, 0
      %v479 = vsel %vm351, 1, 0
      %v480 = vsel %vm352, 1, 0
      %v481 = vsel %vm353, 1, 0
      %v482 = vsel %vm354, 1, 0
      %v483 = vsel %vm355, 1, 0
      %v484 = vsel %vm356, 1, 0
      %v485 = vsel %vm357, 1, 0
      %v486 = vsel %vm358, 1, 0
      %v487 = vsel %vm359, 1, 0
      %v488 = vsel %vm360, 1, 0
      %v489 = vsel %vm361, 1, 0
      %v490 = vsel %vm362, 1, 0
      %v491 = vsel %vm363, 1, 0
      %v492 = vsel %vm364, 1, 0
      %v493 = vsel %vm365, 1, 0
      %v494 = vsel %vm366, 1, 0
      %v495 = vsel %vm367, 1, 0
      %v496 = vsel %vm368, 1, 0
      %v497 = vsel %vm369, 1, 0
      %v498 = vsel %vm370, 1, 0
      %v499 = vsel %vm371, 1, 0
      %v500 = vsel %vm372, 1, 0
      %v501 = vsel %vm373, 1, 0
      %v502 = vsel %vm374, 1, 0
      %v503 = vsel %vm375, 1, 0
      %v504 = vsel %vm376, 1, 0
      %v505 = vsel %vm377, 1, 0
      %v506 = vsel %vm378, 1, 0
      %v507 = vsel %vm379, 1, 0
      %v508 = vsel %vm380, 1, 0
      %v509 = vsel %vm381, 1, 0
      %v510 = vsel %vm382, 1, 0
      %v511 = vsel %vm383, 1, 0
      %v512 = vsel %vm384, 1, 0
      %v513 = vsel %vm385, 1, 0
      %v514 = vsel %vm386, 1, 0
      %v515 = vsel %vm387, 1, 0
      %v516 = vsel %vm388, 1, 0
      %v517 = vsel %vm389, 1, 0
      %v518 = vsel %vm390, 1, 0
      %v519 = vsel %vm391, 1, 0
      %v520 = vsel %vm392, 1, 0
      %v521 = vsel %vm393, 1, 0
      %vm522 = vcmp.eq.s32.totalorder %v458, 1
      %vm523 = vcmp.eq.s32.totalorder %v459, 1
      %vm524 = vcmp.eq.s32.totalorder %v460, 1
      %vm525 = vcmp.eq.s32.totalorder %v461, 1
      %vm526 = vcmp.eq.s32.totalorder %v462, 1
      %vm527 = vcmp.eq.s32.totalorder %v463, 1
      %vm528 = vcmp.eq.s32.totalorder %v464, 1
      %vm529 = vcmp.eq.s32.totalorder %v465, 1
      %vm530 = vcmp.eq.s32.totalorder %v466, 1
      %vm531 = vcmp.eq.s32.totalorder %v467, 1
      %vm532 = vcmp.eq.s32.totalorder %v468, 1
      %vm533 = vcmp.eq.s32.totalorder %v469, 1
      %vm534 = vcmp.eq.s32.totalorder %v470, 1
      %vm535 = vcmp.eq.s32.totalorder %v471, 1
      %vm536 = vcmp.eq.s32.totalorder %v472, 1
      %vm537 = vcmp.eq.s32.totalorder %v473, 1
      %vm538 = vcmp.eq.s32.totalorder %v474, 1
      %vm539 = vcmp.eq.s32.totalorder %v475, 1
      %vm540 = vcmp.eq.s32.totalorder %v476, 1
      %vm541 = vcmp.eq.s32.totalorder %v477, 1
      %vm542 = vcmp.eq.s32.totalorder %v478, 1
      %vm543 = vcmp.eq.s32.totalorder %v479, 1
      %vm544 = vcmp.eq.s32.totalorder %v480, 1
      %vm545 = vcmp.eq.s32.totalorder %v481, 1
      %vm546 = vcmp.eq.s32.totalorder %v482, 1
      %vm547 = vcmp.eq.s32.totalorder %v483, 1
      %vm548 = vcmp.eq.s32.totalorder %v484, 1
      %vm549 = vcmp.eq.s32.totalorder %v485, 1
      %vm550 = vcmp.eq.s32.totalorder %v486, 1
      %vm551 = vcmp.eq.s32.totalorder %v487, 1
      %vm552 = vcmp.eq.s32.totalorder %v488, 1
      %vm553 = vcmp.eq.s32.totalorder %v489, 1
      %vm554 = vcmp.eq.s32.totalorder %v490, 1
      %vm555 = vcmp.eq.s32.totalorder %v491, 1
      %vm556 = vcmp.eq.s32.totalorder %v492, 1
      %vm557 = vcmp.eq.s32.totalorder %v493, 1
      %vm558 = vcmp.eq.s32.totalorder %v494, 1
      %vm559 = vcmp.eq.s32.totalorder %v495, 1
      %vm560 = vcmp.eq.s32.totalorder %v496, 1
      %vm561 = vcmp.eq.s32.totalorder %v497, 1
      %vm562 = vcmp.eq.s32.totalorder %v498, 1
      %vm563 = vcmp.eq.s32.totalorder %v499, 1
      %vm564 = vcmp.eq.s32.totalorder %v500, 1
      %vm565 = vcmp.eq.s32.totalorder %v501, 1
      %vm566 = vcmp.eq.s32.totalorder %v502, 1
      %vm567 = vcmp.eq.s32.totalorder %v503, 1
      %vm568 = vcmp.eq.s32.totalorder %v504, 1
      %vm569 = vcmp.eq.s32.totalorder %v505, 1
      %vm570 = vcmp.eq.s32.totalorder %v506, 1
      %vm571 = vcmp.eq.s32.totalorder %v507, 1
      %vm572 = vcmp.eq.s32.totalorder %v508, 1
      %vm573 = vcmp.eq.s32.totalorder %v509, 1
      %vm574 = vcmp.eq.s32.totalorder %v510, 1
      %vm575 = vcmp.eq.s32.totalorder %v511, 1
      %vm576 = vcmp.eq.s32.totalorder %v512, 1
      %vm577 = vcmp.eq.s32.totalorder %v513, 1
      %vm578 = vcmp.eq.s32.totalorder %v514, 1
      %vm579 = vcmp.eq.s32.totalorder %v515, 1
      %vm580 = vcmp.eq.s32.totalorder %v516, 1
      %vm581 = vcmp.eq.s32.totalorder %v517, 1
      %vm582 = vcmp.eq.s32.totalorder %v518, 1
      %vm583 = vcmp.eq.s32.totalorder %v519, 1
      %vm584 = vcmp.eq.s32.totalorder %v520, 1
      %vm585 = vcmp.eq.s32.totalorder %v521, 1
      %v586 = vsel %vm522, %v394, 0.0
      %v587 = vsel %vm523, %v395, 0.0
      %v588 = vsel %vm524, %v396, 0.0
      %v589 = vsel %vm525, %v397, 0.0
      %v590 = vsel %vm526, %v398, 0.0
      %v591 = vsel %vm527, %v399, 0.0
      %v592 = vsel %vm528, %v400, 0.0
      %v593 = vsel %vm529, %v401, 0.0
      %v594 = vsel %vm530, %v402, 0.0
      %v595 = vsel %vm531, %v403, 0.0
      %v596 = vsel %vm532, %v404, 0.0
      %v597 = vsel %vm533, %v405, 0.0
      %v598 = vsel %vm534, %v406, 0.0
      %v599 = vsel %vm535, %v407, 0.0
      %v600 = vsel %vm536, %v408, 0.0
      %v601 = vsel %vm537, %v409, 0.0
      %v602 = vsel %vm538, %v410, 0.0
      %v603 = vsel %vm539, %v411, 0.0
      %v604 = vsel %vm540, %v412, 0.0
      %v605 = vsel %vm541, %v413, 0.0
      %v606 = vsel %vm542, %v414, 0.0
      %v607 = vsel %vm543, %v415, 0.0
      %v608 = vsel %vm544, %v416, 0.0
      %v609 = vsel %vm545, %v417, 0.0
      %v610 = vsel %vm546, %v418, 0.0
      %v611 = vsel %vm547, %v419, 0.0
      %v612 = vsel %vm548, %v420, 0.0
      %v613 = vsel %vm549, %v421, 0.0
      %v614 = vsel %vm550, %v422, 0.0
      %v615 = vsel %vm551, %v423, 0.0
      %v616 = vsel %vm552, %v424, 0.0
      %v617 = vsel %vm553, %v425, 0.0
      %v618 = vsel %vm554, %v426, 0.0
      %v619 = vsel %vm555, %v427, 0.0
      %v620 = vsel %vm556, %v428, 0.0
      %v621 = vsel %vm557, %v429, 0.0
      %v622 = vsel %vm558, %v430, 0.0
      %v623 = vsel %vm559, %v431, 0.0
      %v624 = vsel %vm560, %v432, 0.0
      %v625 = vsel %vm561, %v433, 0.0
      %v626 = vsel %vm562, %v434, 0.0
      %v627 = vsel %vm563, %v435, 0.0
      %v628 = vsel %vm564, %v436, 0.0
      %v629 = vsel %vm565, %v437, 0.0
      %v630 = vsel %vm566, %v438, 0.0
      %v631 = vsel %vm567, %v439, 0.0
      %v632 = vsel %vm568, %v440, 0.0
      %v633 = vsel %vm569, %v441, 0.0
      %v634 = vsel %vm570, %v442, 0.0
      %v635 = vsel %vm571, %v443, 0.0
      %v636 = vsel %vm572, %v444, 0.0
      %v637 = vsel %vm573, %v445, 0.0
      %v638 = vsel %vm574, %v446, 0.0
      %v639 = vsel %vm575, %v447, 0.0
      %v640 = vsel %vm576, %v448, 0.0
      %v641 = vsel %vm577, %v449, 0.0
      %v642 = vsel %vm578, %v450, 0.0
      %v643 = vsel %vm579, %v451, 0.0
      %v644 = vsel %vm580, %v452, 0.0
      %v645 = vsel %vm581, %v453, 0.0
      %v646 = vsel %vm582, %v454, 0.0
      %v647 = vsel %vm583, %v455, 0.0
      %v648 = vsel %vm584, %v456, 0.0
      %v649 = vsel %vm585, %v457, 0.0
      %v650 = vpack.c.bf16 %v587, %v586
      %v651 = vpack.c.bf16 %v589, %v588
      %v652 = vpack.c.bf16 %v591, %v590
      %v653 = vpack.c.bf16 %v593, %v592
      %v654 = vpack.c.bf16 %v595, %v594
      %v655 = vpack.c.bf16 %v597, %v596
      %v656 = vpack.c.bf16 %v599, %v598
      %v657 = vpack.c.bf16 %v601, %v600
      %v658 = vpack.c.bf16 %v603, %v602
      %v659 = vpack.c.bf16 %v605, %v604
      %v660 = vpack.c.bf16 %v607, %v606
      %v661 = vpack.c.bf16 %v609, %v608
      %v662 = vpack.c.bf16 %v611, %v610
      %v663 = vpack.c.bf16 %v613, %v612
      %v664 = vpack.c.bf16 %v615, %v614
      %v665 = vpack.c.bf16 %v617, %v616
      %v666 = vpack.c.bf16 %v619, %v618
      %v667 = vpack.c.bf16 %v621, %v620
      %v668 = vpack.c.bf16 %v623, %v622
      %v669 = vpack.c.bf16 %v625, %v624
      %v670 = vpack.c.bf16 %v627, %v626
      %v671 = vpack.c.bf16 %v629, %v628
      %v672 = vpack.c.bf16 %v631, %v630
      %v673 = vpack.c.bf16 %v633, %v632
      %v674 = vpack.c.bf16 %v635, %v634
      %v675 = vpack.c.bf16 %v637, %v636
      %v676 = vpack.c.bf16 %v639, %v638
      %v677 = vpack.c.bf16 %v641, %v640
      %v678 = vpack.c.bf16 %v643, %v642
      %v679 = vpack.c.bf16 %v645, %v644
      %v680 = vpack.c.bf16 %v647, %v646
      %v681 = vpack.c.bf16 %v649, %v648
      %v682 = vld [vmem:[%s1] sm:$0xf]
      %v683 = vld [vmem:[%s1 + $0x4] sm:$0xf]
      %v684 = vld [vmem:[%s1 + $0x8] sm:$0xf]
      %v685 = vld [vmem:[%s1 + $0xc] sm:$0xf]
      %v690 = vunpack.c.l.b16 %v682
      %v691 = vunpack.c.l.b16 %v683
      %v692 = vunpack.c.l.b16 %v684
      %v693 = vunpack.c.l.b16 %v685
      %v694 = vpack.c.b16 %v691, %v690
      %v695 = vpack.c.b16 %v693, %v692
      %vm698 = vcmask 261120
      %v700 = vsel %vm698, %v650, 0
      %v703 = vsel %vm698, %v651, 0
      %v706 = vsel %vm698, %v652, 0
      %v709 = vsel %vm698, %v653, 0
      %v712 = vsel %vm698, %v654, 0
      %v715 = vsel %vm698, %v655, 0
      %v718 = vsel %vm698, %v656, 0
      %v721 = vsel %vm698, %v657, 0
      %v724 = vsel %vm698, %v658, 0
      %v727 = vsel %vm698, %v659, 0
      %v730 = vsel %vm698, %v660, 0
      %v733 = vsel %vm698, %v661, 0
      %v736 = vsel %vm698, %v662, 0
      %v739 = vsel %vm698, %v663, 0
      %v742 = vsel %vm698, %v664, 0
      %v745 = vsel %vm698, %v665, 0
      %v748 = vsel %vm698, %v666, 0
      %v751 = vsel %vm698, %v667, 0
      %v754 = vsel %vm698, %v668, 0
      %v757 = vsel %vm698, %v669, 0
      %v760 = vsel %vm698, %v670, 0
      %v763 = vsel %vm698, %v671, 0
      %v766 = vsel %vm698, %v672, 0
      %v769 = vsel %vm698, %v673, 0
      %v772 = vsel %vm698, %v674, 0
      %v775 = vsel %vm698, %v675, 0
      %v778 = vsel %vm698, %v676, 0
      %v781 = vsel %vm698, %v677, 0
      %v784 = vsel %vm698, %v678, 0
      %v787 = vsel %vm698, %v679, 0
      %v790 = vsel %vm698, %v680, 0
      %v793 = vsel %vm698, %v681, 0
      %795 = vmatpush.bf16.msra.mxu0 0
      %796 = vmatpush.bf16.msra.mxu0 0
      %797 = vmatpush.bf16.msra.mxu0 0
      %798 = vmatpush.bf16.msra.mxu0 0
      %799 = vmatpush.bf16.msra.mxu0 0
      %800 = vmatpush.bf16.msra.mxu0 0
      %801 = vmatpush.bf16.msra.mxu0 %v695
      %802 = vmatpush.bf16.msra.mxu0 %v694
      %803 = vmatmul.bf16.gmra.mxu0 %v700
      %v804 = vpop.f32.mrf.mxu0
      %v805 = vadd.f32 0.0, %v804
      %v806 = vpop.f32.mrf.mxu0
      %v807 = vadd.f32 0.0, %v806
      %808 = vmatmul.bf16.gmra.mxu0 %v703
      %v809 = vpop.f32.mrf.mxu0
      %v810 = vadd.f32 0.0, %v809
      %v811 = vpop.f32.mrf.mxu0
      %v812 = vadd.f32 0.0, %v811
      %813 = vmatmul.bf16.gmra.mxu0 %v706
      %v814 = vpop.f32.mrf.mxu0
      %v815 = vadd.f32 0.0, %v814
      %v816 = vpop.f32.mrf.mxu0
      %v817 = vadd.f32 0.0, %v816
      %818 = vmatmul.bf16.gmra.mxu0 %v709
      %v819 = vpop.f32.mrf.mxu0
      %v820 = vadd.f32 0.0, %v819
      %v821 = vpop.f32.mrf.mxu0
      %v822 = vadd.f32 0.0, %v821
      %823 = vmatmul.bf16.gmra.mxu0 %v712
      %v824 = vpop.f32.mrf.mxu0
      %v825 = vadd.f32 0.0, %v824
      %v826 = vpop.f32.mrf.mxu0
      %v827 = vadd.f32 0.0, %v826
      %828 = vmatmul.bf16.gmra.mxu0 %v715
      %v829 = vpop.f32.mrf.mxu0
      %v830 = vadd.f32 0.0, %v829
      %v831 = vpop.f32.mrf.mxu0
      %v832 = vadd.f32 0.0, %v831
      %833 = vmatmul.bf16.gmra.mxu0 %v718
      %v834 = vpop.f32.mrf.mxu0
      %v835 = vadd.f32 0.0, %v834
      %v836 = vpop.f32.mrf.mxu0
      %v837 = vadd.f32 0.0, %v836
      %838 = vmatmul.bf16.gmra.mxu0 %v721
      %v839 = vpop.f32.mrf.mxu0
      %v840 = vadd.f32 0.0, %v839
      %v841 = vpop.f32.mrf.mxu0
      %v842 = vadd.f32 0.0, %v841
      %843 = vmatmul.bf16.gmra.mxu0 %v724
      %v844 = vpop.f32.mrf.mxu0
      %v845 = vadd.f32 0.0, %v844
      %v846 = vpop.f32.mrf.mxu0
      %v847 = vadd.f32 0.0, %v846
      %848 = vmatmul.bf16.gmra.mxu0 %v727
      %v849 = vpop.f32.mrf.mxu0
      %v850 = vadd.f32 0.0, %v849
      %v851 = vpop.f32.mrf.mxu0
      %v852 = vadd.f32 0.0, %v851
      %853 = vmatmul.bf16.gmra.mxu0 %v730
      %v854 = vpop.f32.mrf.mxu0
      %v855 = vadd.f32 0.0, %v854
      %v856 = vpop.f32.mrf.mxu0
      %v857 = vadd.f32 0.0, %v856
      %858 = vmatmul.bf16.gmra.mxu0 %v733
      %v859 = vpop.f32.mrf.mxu0
      %v860 = vadd.f32 0.0, %v859
      %v861 = vpop.f32.mrf.mxu0
      %v862 = vadd.f32 0.0, %v861
      %863 = vmatmul.bf16.gmra.mxu0 %v736
      %v864 = vpop.f32.mrf.mxu0
      %v865 = vadd.f32 0.0, %v864
      %v866 = vpop.f32.mrf.mxu0
      %v867 = vadd.f32 0.0, %v866
      %868 = vmatmul.bf16.gmra.mxu0 %v739
      %v869 = vpop.f32.mrf.mxu0
      %v870 = vadd.f32 0.0, %v869
      %v871 = vpop.f32.mrf.mxu0
      %v872 = vadd.f32 0.0, %v871
      %873 = vmatmul.bf16.gmra.mxu0 %v742
      %v874 = vpop.f32.mrf.mxu0
      %v875 = vadd.f32 0.0, %v874
      %v876 = vpop.f32.mrf.mxu0
      %v877 = vadd.f32 0.0, %v876
      %878 = vmatmul.bf16.gmra.mxu0 %v745
      %v879 = vpop.f32.mrf.mxu0
      %v880 = vadd.f32 0.0, %v879
      %v881 = vpop.f32.mrf.mxu0
      %v882 = vadd.f32 0.0, %v881
      %883 = vmatmul.bf16.gmra.mxu0 %v748
      %v884 = vpop.f32.mrf.mxu0
      %v885 = vadd.f32 0.0, %v884
      %v886 = vpop.f32.mrf.mxu0
      %v887 = vadd.f32 0.0, %v886
      %888 = vmatmul.bf16.gmra.mxu0 %v751
      %v889 = vpop.f32.mrf.mxu0
      %v890 = vadd.f32 0.0, %v889
      %v891 = vpop.f32.mrf.mxu0
      %v892 = vadd.f32 0.0, %v891
      %893 = vmatmul.bf16.gmra.mxu0 %v754
      %v894 = vpop.f32.mrf.mxu0
      %v895 = vadd.f32 0.0, %v894
      %v896 = vpop.f32.mrf.mxu0
      %v897 = vadd.f32 0.0, %v896
      %898 = vmatmul.bf16.gmra.mxu0 %v757
      %v899 = vpop.f32.mrf.mxu0
      %v900 = vadd.f32 0.0, %v899
      %v901 = vpop.f32.mrf.mxu0
      %v902 = vadd.f32 0.0, %v901
      %903 = vmatmul.bf16.gmra.mxu0 %v760
      %v904 = vpop.f32.mrf.mxu0
      %v905 = vadd.f32 0.0, %v904
      %v906 = vpop.f32.mrf.mxu0
      %v907 = vadd.f32 0.0, %v906
      %908 = vmatmul.bf16.gmra.mxu0 %v763
      %v909 = vpop.f32.mrf.mxu0
      %v910 = vadd.f32 0.0, %v909
      %v911 = vpop.f32.mrf.mxu0
      %v912 = vadd.f32 0.0, %v911
      %913 = vmatmul.bf16.gmra.mxu0 %v766
      %v914 = vpop.f32.mrf.mxu0
      %v915 = vadd.f32 0.0, %v914
      %v916 = vpop.f32.mrf.mxu0
      %v917 = vadd.f32 0.0, %v916
      %918 = vmatmul.bf16.gmra.mxu0 %v769
      %v919 = vpop.f32.mrf.mxu0
      %v920 = vadd.f32 0.0, %v919
      %v921 = vpop.f32.mrf.mxu0
      %v922 = vadd.f32 0.0, %v921
      %923 = vmatmul.bf16.gmra.mxu0 %v772
      %v924 = vpop.f32.mrf.mxu0
      %v925 = vadd.f32 0.0, %v924
      %v926 = vpop.f32.mrf.mxu0
      %v927 = vadd.f32 0.0, %v926
      %928 = vmatmul.bf16.gmra.mxu0 %v775
      %v929 = vpop.f32.mrf.mxu0
      %v930 = vadd.f32 0.0, %v929
      %v931 = vpop.f32.mrf.mxu0
      %v932 = vadd.f32 0.0, %v931
      %933 = vmatmul.bf16.gmra.mxu0 %v778
      %v934 = vpop.f32.mrf.mxu0
      %v935 = vadd.f32 0.0, %v934
      %v936 = vpop.f32.mrf.mxu0
      %v937 = vadd.f32 0.0, %v936
      %938 = vmatmul.bf16.gmra.mxu0 %v781
      %v939 = vpop.f32.mrf.mxu0
      %v940 = vadd.f32 0.0, %v939
      %v941 = vpop.f32.mrf.mxu0
      %v942 = vadd.f32 0.0, %v941
      %943 = vmatmul.bf16.gmra.mxu0 %v784
      %v944 = vpop.f32.mrf.mxu0
      %v945 = vadd.f32 0.0, %v944
      %v946 = vpop.f32.mrf.mxu0
      %v947 = vadd.f32 0.0, %v946
      %948 = vmatmul.bf16.gmra.mxu0 %v787
      %v949 = vpop.f32.mrf.mxu0
      %v950 = vadd.f32 0.0, %v949
      %v951 = vpop.f32.mrf.mxu0
      %v952 = vadd.f32 0.0, %v951
      %953 = vmatmul.bf16.gmra.mxu0 %v790
      %v954 = vpop.f32.mrf.mxu0
      %v955 = vadd.f32 0.0, %v954
      %v956 = vpop.f32.mrf.mxu0
      %v957 = vadd.f32 0.0, %v956
      %958 = vmatmul.bf16.gmra.mxu0 %v793
      %v959 = vpop.f32.mrf.mxu0
      %v960 = vadd.f32 0.0, %v959
      %v961 = vpop.f32.mrf.mxu0
      %v962 = vadd.f32 0.0, %v961
      %963 = vdwg.mxu0
      %v964 = vadd.f32 %v805, %v807
      %v965 = vadd.f32 %v964, %v810
      %v966 = vadd.f32 %v965, %v812
      %v967 = vadd.f32 %v966, %v815
      %v968 = vadd.f32 %v967, %v817
      %v969 = vadd.f32 %v968, %v820
      %v970 = vadd.f32 %v969, %v822
      %v971 = vadd.f32 %v970, %v825
      %v972 = vadd.f32 %v971, %v827
      %v973 = vadd.f32 %v972, %v830
      %v974 = vadd.f32 %v973, %v832
      %v975 = vadd.f32 %v974, %v835
      %v976 = vadd.f32 %v975, %v837
      %v977 = vadd.f32 %v976, %v840
      %v978 = vadd.f32 %v977, %v842
      %v979 = vadd.f32 %v978, %v845
      %v980 = vadd.f32 %v979, %v847
      %v981 = vadd.f32 %v980, %v850
      %v982 = vadd.f32 %v981, %v852
      %v983 = vadd.f32 %v982, %v855
      %v984 = vadd.f32 %v983, %v857
      %v985 = vadd.f32 %v984, %v860
      %v986 = vadd.f32 %v985, %v862
      %v987 = vadd.f32 %v986, %v865
      %v988 = vadd.f32 %v987, %v867
      %v989 = vadd.f32 %v988, %v870
      %v990 = vadd.f32 %v989, %v872
      %v991 = vadd.f32 %v990, %v875
      %v992 = vadd.f32 %v991, %v877
      %v993 = vadd.f32 %v992, %v880
      %v994 = vadd.f32 %v993, %v882
      %v995 = vadd.f32 %v994, %v885
      %v996 = vadd.f32 %v995, %v887
      %v997 = vadd.f32 %v996, %v890
      %v998 = vadd.f32 %v997, %v892
      %v999 = vadd.f32 %v998, %v895
      %v1000 = vadd.f32 %v999, %v897
      %v1001 = vadd.f32 %v1000, %v900
      %v1002 = vadd.f32 %v1001, %v902
      %v1003 = vadd.f32 %v1002, %v905
      %v1004 = vadd.f32 %v1003, %v907
      %v1005 = vadd.f32 %v1004, %v910
      %v1006 = vadd.f32 %v1005, %v912
      %v1007 = vadd.f32 %v1006, %v915
      %v1008 = vadd.f32 %v1007, %v917
      %v1009 = vadd.f32 %v1008, %v920
      %v1010 = vadd.f32 %v1009, %v922
      %v1011 = vadd.f32 %v1010, %v925
      %v1012 = vadd.f32 %v1011, %v927
      %v1013 = vadd.f32 %v1012, %v930
      %v1014 = vadd.f32 %v1013, %v932
      %v1015 = vadd.f32 %v1014, %v935
      %v1016 = vadd.f32 %v1015, %v937
      %v1017 = vadd.f32 %v1016, %v940
      %v1018 = vadd.f32 %v1017, %v942
      %v1019 = vadd.f32 %v1018, %v945
      %v1020 = vadd.f32 %v1019, %v947
      %v1021 = vadd.f32 %v1020, %v950
      %v1022 = vadd.f32 %v1021, %v952
      %v1023 = vadd.f32 %v1022, %v955
      %v1024 = vadd.f32 %v1023, %v957
      %v1025 = vadd.f32 %v1024, %v960
      %v1026 = vadd.f32 %v1025, %v962
      %v1027 = vrot.slane %v1026, 4
      %v1028 = vadd.f32 %v1026, %v1027
      %v1029 = vrot.slane %v1028, 2
      %v1030 = vadd.f32 %v1028, %v1029
      %v1031 = vrot.slane %v1030, 1
      %v1032 = vadd.f32 %v1030, %v1031
      %1033 = vst [vmem:[%s194] sm:$0x1] %v1032
      %v1034 = vmul.f32 %v805, %v805
      %v1035 = vmul.f32 %v807, %v807
      %v1036 = vmul.f32 %v810, %v810
      %v1037 = vmul.f32 %v812, %v812
      %v1038 = vmul.f32 %v815, %v815
      %v1039 = vmul.f32 %v817, %v817
      %v1040 = vmul.f32 %v820, %v820
      %v1041 = vmul.f32 %v822, %v822
      %v1042 = vmul.f32 %v825, %v825
      %v1043 = vmul.f32 %v827, %v827
      %v1044 = vmul.f32 %v830, %v830
      %v1045 = vmul.f32 %v832, %v832
      %v1046 = vmul.f32 %v835, %v835
      %v1047 = vmul.f32 %v837, %v837
      %v1048 = vmul.f32 %v840, %v840
      %v1049 = vmul.f32 %v842, %v842
      %v1050 = vmul.f32 %v845, %v845
      %v1051 = vmul.f32 %v847, %v847
      %v1052 = vmul.f32 %v850, %v850
      %v1053 = vmul.f32 %v852, %v852
      %v1054 = vmul.f32 %v855, %v855
      %v1055 = vmul.f32 %v857, %v857
      %v1056 = vmul.f32 %v860, %v860
      %v1057 = vmul.f32 %v862, %v862
      %v1058 = vmul.f32 %v865, %v865
      %v1059 = vmul.f32 %v867, %v867
      %v1060 = vmul.f32 %v870, %v870
      %v1061 = vmul.f32 %v872, %v872
      %v1062 = vmul.f32 %v875, %v875
      %v1063 = vmul.f32 %v877, %v877
      %v1064 = vmul.f32 %v880, %v880
      %v1065 = vmul.f32 %v882, %v882
      %v1066 = vmul.f32 %v885, %v885
      %v1067 = vmul.f32 %v887, %v887
      %v1068 = vmul.f32 %v890, %v890
      %v1069 = vmul.f32 %v892, %v892
      %v1070 = vmul.f32 %v895, %v895
      %v1071 = vmul.f32 %v897, %v897
      %v1072 = vmul.f32 %v900, %v900
      %v1073 = vmul.f32 %v902, %v902
      %v1074 = vmul.f32 %v905, %v905
      %v1075 = vmul.f32 %v907, %v907
      %v1076 = vmul.f32 %v910, %v910
      %v1077 = vmul.f32 %v912, %v912
      %v1078 = vmul.f32 %v915, %v915
      %v1079 = vmul.f32 %v917, %v917
      %v1080 = vmul.f32 %v920, %v920
      %v1081 = vmul.f32 %v922, %v922
      %v1082 = vmul.f32 %v925, %v925
      %v1083 = vmul.f32 %v927, %v927
      %v1084 = vmul.f32 %v930, %v930
      %v1085 = vmul.f32 %v932, %v932
      %v1086 = vmul.f32 %v935, %v935
      %v1087 = vmul.f32 %v937, %v937
      %v1088 = vmul.f32 %v940, %v940
      %v1089 = vmul.f32 %v942, %v942
      %v1090 = vmul.f32 %v945, %v945
      %v1091 = vmul.f32 %v947, %v947
      %v1092 = vmul.f32 %v950, %v950
      %v1093 = vmul.f32 %v952, %v952
      %v1094 = vmul.f32 %v955, %v955
      %v1095 = vmul.f32 %v957, %v957
      %v1096 = vmul.f32 %v960, %v960
      %v1097 = vmul.f32 %v962, %v962
      %v1098 = vadd.f32 %v1034, %v1035
      %v1099 = vadd.f32 %v1098, %v1036
      %v1100 = vadd.f32 %v1099, %v1037
      %v1101 = vadd.f32 %v1100, %v1038
      %v1102 = vadd.f32 %v1101, %v1039
      %v1103 = vadd.f32 %v1102, %v1040
      %v1104 = vadd.f32 %v1103, %v1041
      %v1105 = vadd.f32 %v1104, %v1042
      %v1106 = vadd.f32 %v1105, %v1043
      %v1107 = vadd.f32 %v1106, %v1044
      %v1108 = vadd.f32 %v1107, %v1045
      %v1109 = vadd.f32 %v1108, %v1046
      %v1110 = vadd.f32 %v1109, %v1047
      %v1111 = vadd.f32 %v1110, %v1048
      %v1112 = vadd.f32 %v1111, %v1049
      %v1113 = vadd.f32 %v1112, %v1050
      %v1114 = vadd.f32 %v1113, %v1051
      %v1115 = vadd.f32 %v1114, %v1052
      %v1116 = vadd.f32 %v1115, %v1053
      %v1117 = vadd.f32 %v1116, %v1054
      %v1118 = vadd.f32 %v1117, %v1055
      %v1119 = vadd.f32 %v1118, %v1056
      %v1120 = vadd.f32 %v1119, %v1057
      %v1121 = vadd.f32 %v1120, %v1058
      %v1122 = vadd.f32 %v1121, %v1059
      %v1123 = vadd.f32 %v1122, %v1060
      %v1124 = vadd.f32 %v1123, %v1061
      %v1125 = vadd.f32 %v1124, %v1062
      %v1126 = vadd.f32 %v1125, %v1063
      %v1127 = vadd.f32 %v1126, %v1064
      %v1128 = vadd.f32 %v1127, %v1065
      %v1129 = vadd.f32 %v1128, %v1066
      %v1130 = vadd.f32 %v1129, %v1067
      %v1131 = vadd.f32 %v1130, %v1068
      %v1132 = vadd.f32 %v1131, %v1069
      %v1133 = vadd.f32 %v1132, %v1070
      %v1134 = vadd.f32 %v1133, %v1071
      %v1135 = vadd.f32 %v1134, %v1072
      %v1136 = vadd.f32 %v1135, %v1073
      %v1137 = vadd.f32 %v1136, %v1074
      %v1138 = vadd.f32 %v1137, %v1075
      %v1139 = vadd.f32 %v1138, %v1076
      %v1140 = vadd.f32 %v1139, %v1077
      %v1141 = vadd.f32 %v1140, %v1078
      %v1142 = vadd.f32 %v1141, %v1079
      %v1143 = vadd.f32 %v1142, %v1080
      %v1144 = vadd.f32 %v1143, %v1081
      %v1145 = vadd.f32 %v1144, %v1082
      %v1146 = vadd.f32 %v1145, %v1083
      %v1147 = vadd.f32 %v1146, %v1084
      %v1148 = vadd.f32 %v1147, %v1085
      %v1149 = vadd.f32 %v1148, %v1086
      %v1150 = vadd.f32 %v1149, %v1087
      %v1151 = vadd.f32 %v1150, %v1088
      %v1152 = vadd.f32 %v1151, %v1089
      %v1153 = vadd.f32 %v1152, %v1090
      %v1154 = vadd.f32 %v1153, %v1091
      %v1155 = vadd.f32 %v1154, %v1092
      %v1156 = vadd.f32 %v1155, %v1093
      %v1157 = vadd.f32 %v1156, %v1094
      %v1158 = vadd.f32 %v1157, %v1095
      %v1159 = vadd.f32 %v1158, %v1096
      %v1160 = vadd.f32 %v1159, %v1097
      %v1161 = vrot.slane %v1160, 4
      %v1162 = vadd.f32 %v1160, %v1161
      %v1163 = vrot.slane %v1162, 2
      %v1164 = vadd.f32 %v1162, %v1163
      %v1165 = vrot.slane %v1164, 1
      %v1166 = vadd.f32 %v1164, %v1165
      %1167 = vst [vmem:[%s197] sm:$0x1] %v1166
      %p1168 = scmp.lt.s32.totalorder %s15, 1
      %s1169 = scalar_select %p1168, %s15, 1
      %s1170 = scalar_lea.vmem %s2, %s1169
      %p1171 = scmp.lt.s32.totalorder %s15, 1
      %s1172 = scalar_select %p1171, %s15, 1
      %s1173 = scalar_lea.vmem %s3, %s1172
      // Predicated region
      $region29: #{vib_classifier_forward.2} parent=27 // pred_check
        %p1174 = pneg %p80
      $region30: #{vib_classifier_forward.2} parent=27 // pred_check_branch
        %1176 = sbr.rel (%p1174) target = $region32
      $region31: #{vib_classifier_forward.2} parent=27 // pred_region
        _
      $region32: #{vib_classifier_forward.2} parent=27 // pred_fallthru
        _
      // Predicated region
      $region33: #{vib_classifier_forward.2} parent=27 // pred_check
        %p1177 = pneg %p106
      $region34: #{vib_classifier_forward.2} parent=27 // pred_check_branch
        %1179 = sbr.rel (%p1177) target = $region36
      $region35: #{vib_classifier_forward.2} parent=27 // pred_region
        _
      $region36: #{vib_classifier_forward.2} parent=27 // pred_fallthru
        _
    $region28: #{vib_classifier_forward.2} parent=5 // pred_fallthru
      _
    %p1180 = scmp.le.s32.totalorder 2, %s10
    // Predicated region
    $region37: #{vib_classifier_forward.2} parent=5 // pred_check
      %p1181 = pneg %p1180
    $region38: #{vib_classifier_forward.2} parent=5 // pred_check_branch
      %1183 = sbr.rel (%p1181) target = $region40
    $region39: #{vib_classifier_forward.2} parent=5 // pred_region
      %s1184 = ssub.s32 %s10, 2
      // Predicated region
      $region41: #{vib_classifier_forward.2} parent=39 // pred_check
        %p1185 = pneg %p86
      $region42: #{vib_classifier_forward.2} parent=39 // pred_check_branch
        %1187 = sbr.rel (%p1185) target = $region44
      $region43: #{vib_classifier_forward.2} parent=39 // pred_region
        %p1188 = scmp.lt.s32.totalorder %s16, 1
        %s1189 = scalar_select %p1188, %s16, 1
        %s1190 = scalar_lea.vmem %s2, %s1189
      $region44: #{vib_classifier_forward.2} parent=39 // pred_fallthru
        _
      // Predicated region
      $region45: #{vib_classifier_forward.2} parent=39 // pred_check
        %p1191 = pneg %p112
      $region46: #{vib_classifier_forward.2} parent=39 // pred_check_branch
        %1193 = sbr.rel (%p1191) target = $region48
      $region47: #{vib_classifier_forward.2} parent=39 // pred_region
        %p1194 = scmp.lt.s32.totalorder %s16, 1
        %s1195 = scalar_select %p1194, %s16, 1
        %s1196 = scalar_lea.vmem %s3, %s1195
      $region48: #{vib_classifier_forward.2} parent=39 // pred_fallthru
        _
    $region40: #{vib_classifier_forward.2} parent=5 // pred_fallthru
      _
  $region6: #{vib_classifier_forward.2} parent=0 // loop_footer
    %s14 = sadd.s32 1, %s10
  $region7: #{vib_classifier_forward.2} parent=0 // loop_footer_branch
    %9 = sbr.rel target = $region3
  $region8: #{vib_classifier_forward.2} parent=0 // loop_exit
    _

</llo_original>
